<compile_context>
chip_gen: v7x
topology: tpu7x:2x2x1
jax: 0.10.0
libtpu: 0.0.40
codegen_flags: <defaults>
</compile_context>

<pallas_src>
import math
from functools import partial

import jax
import jax.numpy as jnp
import numpy as np
from jax.experimental import pallas as pl
from jax.experimental.pallas import tpu as pltpu


# ------------------------------ Pallas kernels --------------------------------

def _conv_bn_stats_kernel(x_ref, w_ref, b_ref, y_ref, stats_ref, acc_ref,
                          *, k, dilation, w_out, th):
    """One m-tile of the dilated conv.  grid = (num_m_tiles, k); axis 1 == kh.

    x_ref:     (1, th, Wp, Cin)   bf16  kh-shifted padded-input window for this tile
    w_ref:     (1, k, Cin, Cout)  bf16  all kw taps of weight row kh
    b_ref:     (1, Cout)          f32
    y_ref:     (tm, Cout)         bf16  conv+bias output rows (tm = th * W, NHWC order)
    stats_ref: (1, 8, Cout)       f32   row 0 = column sums, row 1 = column sum-of-squares
    acc_ref:   (tm, Cout)         f32   VMEM accumulator carried across kh
    """
    kh = pl.program_id(1)

    @pl.when(kh == 0)
    def _zero():
        acc_ref[...] = jnp.zeros_like(acc_ref)

    acc = acc_ref[...]
    cin = x_ref.shape[-1]
    # Static unroll over the kw taps: the W shift is a static slice of the VMEM
    # window, so no im2col matrix ever exists in HBM.  (Reshape is layout-trivial
    # when W is a multiple of 8, as in this harness.)
    for kw in range(k):
        xs = x_ref[0, :, kw * dilation: kw * dilation + w_out, :]   # (th, W, Cin) bf16
        xs = xs.reshape(th * w_out, cin)                            # NHWC row order
        acc = acc + jnp.dot(xs, w_ref[0, kw],
                            preferred_element_type=jnp.float32)
    acc_ref[...] = acc

    @pl.when(kh == pl.num_programs(1) - 1)
    def _epilogue():
        yf = acc + b_ref[...]                                       # f32
        y_ref[...] = yf.astype(y_ref.dtype)
        # one-pass BN statistics partials for this tile (f32)
        s = jnp.sum(yf, axis=0, keepdims=True)                      # (1, Cout)
        ss = jnp.sum(yf * yf, axis=0, keepdims=True)                # (1, Cout)
        pad = jnp.zeros((6, s.shape[-1]), jnp.float32)              # pad to 8 sublanes
        stats_ref[0] = jnp.concatenate([s, ss, pad], axis=0)


def _bn_apply_relu_kernel(y_ref, scale_ref, shift_ref, o_ref):
    """y * scale + shift, ReLU.  scale/shift already fold mean/var/gamma/beta (f32)."""
    y = y_ref[...].astype(jnp.float32)
    o_ref[...] = jnp.maximum(y * scale_ref[...] + shift_ref[...], 0.0)


# ---------------------------------- wrapper ------------------------------------

def _pick_th(h, w, target_rows=512):
    """Largest divisor th of h with th*w <= target_rows and (th*w) % 8 == 0."""
    best = None
    for th in range(1, h + 1):
        if h % th:
            continue
        tm = th * w
        if tm % 8:
            continue
        if tm <= target_rows:
            best = th
    if best is not None:
        return best
    for th in range(1, h + 1):
        if h % th == 0 and (th * w) % 8 == 0:
            return th
    # TODO(synk): shapes with no (8,.)-friendly row tile would need row padding + masking.
    return h


def aspp_forward(x_nchw, w_oihw, bias, gamma, beta, dilation, *, target_tile_rows=512):
    """ASPP forward: dilated Conv2d -> BatchNorm2d (train-mode batch stats) -> ReLU."""
    if dilation == 1:
        k, pad = 1, 0
    else:
        k, pad = 3, dilation

    N, Cin, H, W = x_nchw.shape
    Cout = w_oihw.shape[0]

    th = _pick_th(H, W, target_tile_rows)     # output rows of the image per m-tile
    tm = th * W                               # matmul rows per m-tile
    nm = N * (H // th)                        # number of m-tiles (M == nm * tm exactly)
    M = N * H * W
    Wp = W + 2 * pad

    # ---- layout glue (plain JAX): NCHW -> NHWC, pad, k H-shifted bf16 copies ----
    x = jnp.transpose(x_nchw, (0, 2, 3, 1)).astype(jnp.float32)
    xp = jnp.pad(x, ((0, 0), (pad, pad), (pad, pad), (0, 0)))
    x_h = jnp.stack(
        [xp[:, kh * dilation: kh * dilation + H, :, :] for kh in range(k)], axis=0)
    x_h = x_h.reshape(k * nm, th, Wp, Cin).astype(jnp.bfloat16)

    # weight OIHW -> (kh, kw, Cin, Cout); bf16 MXU operand (f32 accumulation in-kernel)
    w_taps = jnp.transpose(w_oihw, (2, 3, 1, 0)).astype(jnp.bfloat16)
    b_row = bias.reshape(1, Cout).astype(jnp.float32)

    vmem_limit = 48 * 1024 * 1024
    conv_flops = 2 * M * (k * k * Cin) * Cout
    conv_bytes = int(x_h.size * 2 + w_taps.size * 2 + M * Cout * 2 + nm * 8 * Cout * 4)

    conv_kernel = partial(_conv_bn_stats_kernel, k=k, dilation=dilation, w_out=W, th=th)

    # --- Pallas kernel 1: dilated conv (bf16 MXU, f32 acc) + bias + BN partial stats ---
    y, stats = pl.pallas_call(
        conv_kernel,
        out_shape=(
            jax.ShapeDtypeStruct((M, Cout), jnp.bfloat16),      # conv + bias (bf16)
            jax.ShapeDtypeStruct((nm, 8, Cout), jnp.float32),   # per-tile sum / sumsq
        ),
        grid=(nm, k),
        in_specs=[
            pl.BlockSpec((1, th, Wp, Cin), lambda i, kh: (kh * nm + i, 0, 0, 0)),
            pl.BlockSpec((1, k, Cin, Cout), lambda i, kh: (kh, 0, 0, 0)),
            pl.BlockSpec((1, Cout), lambda i, kh: (0, 0)),
        ],
        out_specs=(
            pl.BlockSpec((tm, Cout), lambda i, kh: (i, 0)),
            pl.BlockSpec((1, 8, Cout), lambda i, kh: (i, 0, 0)),
        ),
        scratch_shapes=[pltpu.VMEM((tm, Cout), jnp.float32)],
        compiler_params=pltpu.CompilerParams(
            dimension_semantics=("parallel", "arbitrary"),
            vmem_limit_bytes=vmem_limit,
        ),
        cost_estimate=pl.CostEstimate(
            flops=conv_flops, transcendentals=0, bytes_accessed=conv_bytes),
    )(x_h, w_taps, b_row)

    # ---- tiny XLA reduction of the per-tile partials -> folded BN scale/shift ----
    psum = stats[:, 0, :]                       # (nm, Cout)
    psq = stats[:, 1, :]
    mean = jnp.sum(psum, axis=0) / M
    var = jnp.maximum(jnp.sum(psq, axis=0) / M - mean * mean, 0.0)   # biased (train mode)
    inv = jax.lax.rsqrt(var + 1e-5)
    g = gamma.astype(jnp.float32)
    scale = (g * inv).reshape(1, Cout)
    shift = (beta.astype(jnp.float32) - mean * g * inv).reshape(1, Cout)
    # TODO(synk): running_mean / running_var buffer updates (training-time side effect
    # of nn.BatchNorm2d) are not modeled; they do not affect this forward output.

    # --- Pallas kernel 2: tiled, fused BN-apply (scale/shift) + ReLU over M ---
    out_flat = pl.pallas_call(
        _bn_apply_relu_kernel,
        out_shape=jax.ShapeDtypeStruct((M, Cout), jnp.float32),
        grid=(M // tm,),
        in_specs=[
            pl.BlockSpec((tm, Cout), lambda i: (i, 0)),
            pl.BlockSpec((1, Cout), lambda i: (0, 0)),
            pl.BlockSpec((1, Cout), lambda i: (0, 0)),
        ],
        out_specs=pl.BlockSpec((tm, Cout), lambda i: (i, 0)),
        compiler_params=pltpu.CompilerParams(
            dimension_semantics=("parallel",),
            vmem_limit_bytes=vmem_limit,
        ),
        cost_estimate=pl.CostEstimate(
            flops=3 * M * Cout, transcendentals=0,
            bytes_accessed=int(M * Cout * 2 + M * Cout * 4)),
    )(y, scale, shift)

    # (M, Cout) -> NHWC -> NCHW
    out = out_flat.reshape(N, H, W, Cout)
    return jnp.transpose(out, (0, 3, 1, 2))


# ------------------------- pure-JAX reference (check) --------------------------

def aspp_reference(x_nchw, w_oihw, bias, gamma, beta, dilation):
    pad = 0 if dilation == 1 else dilation
    y = jax.lax.conv_general_dilated(
        x_nchw, w_oihw,
        window_strides=(1, 1),
        padding=((pad, pad), (pad, pad)),
        rhs_dilation=(dilation, dilation),
        dimension_numbers=("NCHW", "OIHW", "NCHW"),
        precision=jax.lax.Precision.HIGHEST,
    ) + bias.reshape(1, -1, 1, 1)
    mean = jnp.mean(y, axis=(0, 2, 3), keepdims=True)
    var = jnp.mean(jnp.square(y - mean), axis=(0, 2, 3), keepdims=True)
    yhat = (y - mean) * jax.lax.rsqrt(var + 1e-5)
    return jnp.maximum(
        yhat * gamma.reshape(1, -1, 1, 1) + beta.reshape(1, -1, 1, 1), 0.0
    )


if __name__ == "__main__":
    key = jax.random.PRNGKey(0)
    N, Cin, H, W = 2, 4, 16, 16
    Cout = 8

    fwd = jax.jit(aspp_forward, static_argnums=(5,))

    for dilation in (2, 1):   # dilation=2 -> 3x3 dilated conv, dilation=1 -> 1x1 conv
        ksz = 1 if dilation == 1 else 3
        kx, kw_, kb = jax.random.split(jax.random.fold_in(key, dilation), 3)
        x = jax.random.normal(kx, (N, Cin, H, W), dtype=jnp.float32)

        # Conv2d weight init mirroring _init_weight: normal(0, sqrt(2/n)), n = k*k*Cout
        n = ksz * ksz * Cout
        w = jax.random.normal(kw_, (Cout, Cin, ksz, ksz), dtype=jnp.float32) * math.sqrt(2.0 / n)
        b = jax.random.normal(kb, (Cout,), dtype=jnp.float32) * 0.1
        gamma = jnp.ones((Cout,), dtype=jnp.float32)    # BatchNorm2d weight (fill 1)
        beta = jnp.zeros((Cout,), dtype=jnp.float32)    # BatchNorm2d bias  (zero)

        out = jax.block_until_ready(fwd(x, w, b, gamma, beta, dilation))
        ref = aspp_reference(x, w, b, gamma, beta, dilation)
        assert out.shape == (N, Cout, H, W)
        # bf16 MXU operands + bf16 intermediate y vs an all-f32 reference:
        # tolerance sized for bf16 (~2^-9 relative) quantization, still catches
        # any indexing / tap-alignment / statistics bug (those are O(0.1-1)).
        np.testing.assert_allclose(np.asarray(out), np.asarray(ref),
                                   rtol=3e-2, atol=3e-2)

    print("KERNEL_OK")
</pallas_src>

<mosaic_0001>
module attributes {stable_mosaic.version = 11 : i64} {
  func.func @_conv_bn_stats_kernel(%arg0: i32, %arg1: i32, %arg2: memref<1x16x20x4xbf16, #tpu.memory_space<vmem>>, %arg3: memref<1x3x4x8xbf16, #tpu.memory_space<vmem>>, %arg4: memref<1x8xf32, #tpu.memory_space<vmem>>, %arg5: memref<256x8xbf16, #tpu.memory_space<vmem>>, %arg6: memref<1x8x8xf32, #tpu.memory_space<vmem>>, %arg7: memref<256x8xf32, #tpu.memory_space<vmem>>) attributes {dimension_semantics = [#tpu.dimension_semantics<parallel>, #tpu.dimension_semantics<arbitrary>], iteration_bounds = array<i64: 2, 3>, scalar_prefetch = 0 : i64, scratch_operands = 1 : i64, tpu.core_type = #tpu.core_type<tc>, window_params = [{transform_indices = @transform_0, window_bounds = array<i64: 1, 16, 20, 4>}, {transform_indices = @transform_1, window_bounds = array<i64: 1, 3, 4, 8>}, {pipeline_mode = #tpu.pipeline_mode<synchronous>, transform_indices = @transform_2, window_bounds = array<i64: 1, 8>}, {transform_indices = @transform_3, window_bounds = array<i64: 256, 8>}, {transform_indices = @transform_4, window_bounds = array<i64: 1, 8, 8>}]} {
    %c0_i32 = arith.constant 0 : i32
    %0 = arith.cmpi eq, %arg1, %c0_i32 : i32
    %1 = arith.extui %0 : i1 to i32
    %c0_i32_0 = arith.constant 0 : i32
    %2 = arith.cmpi ne, %1, %c0_i32_0 : i32
    scf.if %2 {
      %cst_28 = arith.constant 0.000000e+00 : f32
      %29 = vector.broadcast %cst_28 : f32 to vector<256x8xf32>
      %c0_29 = arith.constant 0 : index
      %c0_30 = arith.constant 0 : index
      %30 = vector.load %arg7[%c0_29, %c0_30] : memref<256x8xf32, #tpu.memory_space<vmem>>, vector<256x8xf32>
      tpu.vector_store %arg7[%c0_29, %c0_30], %29 {strides = array<i32>} : memref<256x8xf32, #tpu.memory_space<vmem>>, vector<256x8xf32>,
    } else {
    }
    %c0 = arith.constant 0 : index
    %c0_1 = arith.constant 0 : index
    %3 = vector.load %arg7[%c0, %c0_1] : memref<256x8xf32, #tpu.memory_space<vmem>>, vector<256x8xf32>
    %c0_2 = arith.constant 0 : index
    %c0_3 = arith.constant 0 : index
    %c0_4 = arith.constant 0 : index
    %c0_5 = arith.constant 0 : index
    %4 = vector.load %arg2[%c0_2, %c0_3, %c0_4, %c0_5] : memref<1x16x20x4xbf16, #tpu.memory_space<vmem>>, vector<1x16x16x4xbf16>
    %5 = vector.shape_cast %4 : vector<1x16x16x4xbf16> to vector<16x16x4xbf16>
    %6 = vector.shape_cast %5 : vector<16x16x4xbf16> to vector<256x4xbf16>
    %c0_6 = arith.constant 0 : index
    %c0_7 = arith.constant 0 : index
    %c0_8 = arith.constant 0 : index
    %c0_9 = arith.constant 0 : index
    %7 = vector.load %arg3[%c0_6, %c0_7, %c0_8, %c0_9] : memref<1x3x4x8xbf16, #tpu.memory_space<vmem>>, vector<1x1x4x8xbf16>
    %8 = vector.shape_cast %7 : vector<1x1x4x8xbf16> to vector<4x8xbf16>
    %cst = arith.constant dense<0.000000e+00> : vector<256x8xf32>
    %9 = tpu.matmul %6, %8, %cst {dimension_numbers = #tpu.dot_dimension_numbers<[1], [0], [0], [1], [0, 0, 1, 1], [], []>} : vector<256x4xbf16>, vector<4x8xbf16>, vector<256x8xf32> -> vector<256x8xf32>
    %10 = arith.addf %3, %9 : vector<256x8xf32>
    %c0_10 = arith.constant 0 : index
    %c0_11 = arith.constant 0 : index
    %c2 = arith.constant 2 : index
    %c0_12 = arith.constant 0 : index
    %11 = vector.load %arg2[%c0_10, %c0_11, %c2, %c0_12] : memref<1x16x20x4xbf16, #tpu.memory_space<vmem>>, vector<1x16x16x4xbf16>
    %12 = vector.shape_cast %11 : vector<1x16x16x4xbf16> to vector<16x16x4xbf16>
    %13 = vector.shape_cast %12 : vector<16x16x4xbf16> to vector<256x4xbf16>
    %c0_13 = arith.constant 0 : index
    %c1 = arith.constant 1 : index
    %c0_14 = arith.constant 0 : index
    %c0_15 = arith.constant 0 : index
    %14 = vector.load %arg3[%c0_13, %c1, %c0_14, %c0_15] : memref<1x3x4x8xbf16, #tpu.memory_space<vmem>>, vector<1x1x4x8xbf16>
    %15 = vector.shape_cast %14 : vector<1x1x4x8xbf16> to vector<4x8xbf16>
    %cst_16 = arith.constant dense<0.000000e+00> : vector<256x8xf32>
    %16 = tpu.matmul %13, %15, %cst_16 {dimension_numbers = #tpu.dot_dimension_numbers<[1], [0], [0], [1], [0, 0, 1, 1], [], []>} : vector<256x4xbf16>, vector<4x8xbf16>, vector<256x8xf32> -> vector<256x8xf32>
    %17 = arith.addf %10, %16 : vector<256x8xf32>
    %c0_17 = arith.constant 0 : index
    %c0_18 = arith.constant 0 : index
    %c4 = arith.constant 4 : index
    %c0_19 = arith.constant 0 : index
    %18 = vector.load %arg2[%c0_17, %c0_18, %c4, %c0_19] : memref<1x16x20x4xbf16, #tpu.memory_space<vmem>>, vector<1x16x16x4xbf16>
    %19 = vector.shape_cast %18 : vector<1x16x16x4xbf16> to vector<16x16x4xbf16>
    %20 = vector.shape_cast %19 : vector<16x16x4xbf16> to vector<256x4xbf16>
    %c0_20 = arith.constant 0 : index
    %c2_21 = arith.constant 2 : index
    %c0_22 = arith.constant 0 : index
    %c0_23 = arith.constant 0 : index
    %21 = vector.load %arg3[%c0_20, %c2_21, %c0_22, %c0_23] : memref<1x3x4x8xbf16, #tpu.memory_space<vmem>>, vector<1x1x4x8xbf16>
    %22 = vector.shape_cast %21 : vector<1x1x4x8xbf16> to vector<4x8xbf16>
    %cst_24 = arith.constant dense<0.000000e+00> : vector<256x8xf32>
    %23 = tpu.matmul %20, %22, %cst_24 {dimension_numbers = #tpu.dot_dimension_numbers<[1], [0], [0], [1], [0, 0, 1, 1], [], []>} : vector<256x4xbf16>, vector<4x8xbf16>, vector<256x8xf32> -> vector<256x8xf32>
    %24 = arith.addf %17, %23 : vector<256x8xf32>
    %c0_25 = arith.constant 0 : index
    %c0_26 = arith.constant 0 : index
    %25 = vector.load %arg7[%c0_25, %c0_26] : memref<256x8xf32, #tpu.memory_space<vmem>>, vector<256x8xf32>
    tpu.vector_store %arg7[%c0_25, %c0_26], %24 {strides = array<i32>} : memref<256x8xf32, #tpu.memory_space<vmem>>, vector<256x8xf32>,
    %c2_i32 = arith.constant 2 : i32
    %26 = arith.cmpi eq, %arg1, %c2_i32 : i32
    %27 = arith.extui %26 : i1 to i32
    %c0_i32_27 = arith.constant 0 : i32
    %28 = arith.cmpi ne, %27, %c0_i32_27 : i32
    scf.if %28 {
      %c0_28 = arith.constant 0 : index
      %c0_29 = arith.constant 0 : index
      %29 = vector.load %arg4[%c0_28, %c0_29] : memref<1x8xf32, #tpu.memory_space<vmem>>, vector<1x8xf32>
      %30 = vector.broadcast %29 : vector<1x8xf32> to vector<256x8xf32>
      %31 = arith.addf %24, %30 : vector<256x8xf32>
      %32 = arith.truncf %31 : vector<256x8xf32> to vector<256x8xbf16>
      %c0_30 = arith.constant 0 : index
      %c0_31 = arith.constant 0 : index
      %33 = vector.load %arg5[%c0_30, %c0_31] : memref<256x8xbf16, #tpu.memory_space<vmem>>, vector<256x8xbf16>
      tpu.vector_store %arg5[%c0_30, %c0_31], %32 {strides = array<i32>} : memref<256x8xbf16, #tpu.memory_space<vmem>>, vector<256x8xbf16>,
      %cst_32 = arith.constant dense<0.000000e+00> : vector<8xf32>
      %34 = vector.multi_reduction <add>, %31, %cst_32 [0] : vector<256x8xf32> to vector<8xf32>
      %35 = vector.shape_cast %34 : vector<8xf32> to vector<1x8xf32>
      %36 = arith.mulf %31, %31 : vector<256x8xf32>
      %cst_33 = arith.constant dense<0.000000e+00> : vector<8xf32>
      %37 = vector.multi_reduction <add>, %36, %cst_33 [0] : vector<256x8xf32> to vector<8xf32>
      %38 = vector.shape_cast %37 : vector<8xf32> to vector<1x8xf32>
      %cst_34 = arith.constant 0.000000e+00 : f32
      %39 = vector.broadcast %cst_34 : f32 to vector<6x8xf32>
      %40 = tpu.concatenate %35, %38, %39 in 0 : vector<1x8xf32>, vector<1x8xf32>, vector<6x8xf32> -> vector<8x8xf32>
      %c0_35 = arith.constant 0 : index
      %c0_36 = arith.constant 0 : index
      %c0_37 = arith.constant 0 : index
      %41 = vector.load %arg6[%c0_35, %c0_36, %c0_37] : memref<1x8x8xf32, #tpu.memory_space<vmem>>, vector<1x8x8xf32>
      %42 = vector.shape_cast %41 : vector<1x8x8xf32> to vector<8x8xf32>
      %43 = vector.shape_cast %40 : vector<8x8xf32> to vector<1x8x8xf32>
      tpu.vector_store %arg6[%c0_35, %c0_36, %c0_37], %43 {strides = array<i32>} : memref<1x8x8xf32, #tpu.memory_space<vmem>>, vector<1x8x8xf32>,
    } else {
    }
    return
  }
  func.func @transform_0(%arg0: i32, %arg1: i32) -> (i32, i32, i32, i32) {
    %c2_i32 = arith.constant 2 : i32
    %0 = arith.muli %arg1, %c2_i32 : i32
    %1 = arith.addi %0, %arg0 : i32
    %c0_i32 = arith.constant 0 : i32
    %c0_i32_0 = arith.constant 0 : i32
    %c0_i32_1 = arith.constant 0 : i32
    %c0_i32_2 = arith.constant 0 : i32
    return %1, %c0_i32, %c0_i32_0, %c0_i32_1 : i32, i32, i32, i32
  }
  func.func @transform_1(%arg0: i32, %arg1: i32) -> (i32, i32, i32, i32) {
    %c0_i32 = arith.constant 0 : i32
    %c0_i32_0 = arith.constant 0 : i32
    %c0_i32_1 = arith.constant 0 : i32
    %c0_i32_2 = arith.constant 0 : i32
    return %arg1, %c0_i32, %c0_i32_0, %c0_i32_1 : i32, i32, i32, i32
  }
  func.func @transform_2(%arg0: i32, %arg1: i32) -> (i32, i32) {
    %c0_i32 = arith.constant 0 : i32
    %c0_i32_0 = arith.constant 0 : i32
    %c0_i32_1 = arith.constant 0 : i32
    return %c0_i32, %c0_i32_0 : i32, i32
  }
  func.func @transform_3(%arg0: i32, %arg1: i32) -> (i32, i32) {
    %c0_i32 = arith.constant 0 : i32
    %c0_i32_0 = arith.constant 0 : i32
    return %arg0, %c0_i32 : i32, i32
  }
  func.func @transform_4(%arg0: i32, %arg1: i32) -> (i32, i32, i32) {
    %c0_i32 = arith.constant 0 : i32
    %c0_i32_0 = arith.constant 0 : i32
    %c0_i32_1 = arith.constant 0 : i32
    return %arg0, %c0_i32, %c0_i32_0 : i32, i32, i32
  }
}

module attributes {stable_mosaic.version = 11 : i64} {
  func.func @_bn_apply_relu_kernel(%arg0: i32, %arg1: memref<256x8xbf16, #tpu.memory_space<vmem>>, %arg2: memref<1x8xf32, #tpu.memory_space<vmem>>, %arg3: memref<1x8xf32, #tpu.memory_space<vmem>>, %arg4: memref<256x8xf32, #tpu.memory_space<vmem>>) attributes {dimension_semantics = [#tpu.dimension_semantics<parallel>], iteration_bounds = array<i64: 2>, scalar_prefetch = 0 : i64, scratch_operands = 0 : i64, tpu.core_type = #tpu.core_type<tc>, window_params = [{transform_indices = @transform_0, window_bounds = array<i64: 256, 8>}, {pipeline_mode = #tpu.pipeline_mode<synchronous>, transform_indices = @transform_1, window_bounds = array<i64: 1, 8>}, {pipeline_mode = #tpu.pipeline_mode<synchronous>, transform_indices = @transform_2, window_bounds = array<i64: 1, 8>}, {transform_indices = @transform_3, window_bounds = array<i64: 256, 8>}]} {
    %c0 = arith.constant 0 : index
    %c0_0 = arith.constant 0 : index
    %0 = vector.load %arg1[%c0, %c0_0] : memref<256x8xbf16, #tpu.memory_space<vmem>>, vector<256x8xbf16>
    %1 = arith.extf %0 : vector<256x8xbf16> to vector<256x8xf32>
    %c0_1 = arith.constant 0 : index
    %c0_2 = arith.constant 0 : index
    %2 = vector.load %arg2[%c0_1, %c0_2] : memref<1x8xf32, #tpu.memory_space<vmem>>, vector<1x8xf32>
    %3 = vector.broadcast %2 : vector<1x8xf32> to vector<256x8xf32>
    %4 = arith.mulf %1, %3 : vector<256x8xf32>
    %c0_3 = arith.constant 0 : index
    %c0_4 = arith.constant 0 : index
    %5 = vector.load %arg3[%c0_3, %c0_4] : memref<1x8xf32, #tpu.memory_space<vmem>>, vector<1x8xf32>
    %6 = vector.broadcast %5 : vector<1x8xf32> to vector<256x8xf32>
    %7 = arith.addf %4, %6 : vector<256x8xf32>
    %cst = arith.constant 0.000000e+00 : f32
    %8 = vector.broadcast %cst : f32 to vector<256x8xf32>
    %9 = arith.maximumf %7, %8 : vector<256x8xf32>
    %c0_5 = arith.constant 0 : index
    %c0_6 = arith.constant 0 : index
    %10 = vector.load %arg4[%c0_5, %c0_6] : memref<256x8xf32, #tpu.memory_space<vmem>>, vector<256x8xf32>
    tpu.vector_store %arg4[%c0_5, %c0_6], %9 {strides = array<i32>} : memref<256x8xf32, #tpu.memory_space<vmem>>, vector<256x8xf32>,
    return
  }
  func.func @transform_0(%arg0: i32) -> (i32, i32) {
    %c0_i32 = arith.constant 0 : i32
    %c0_i32_0 = arith.constant 0 : i32
    return %arg0, %c0_i32 : i32, i32
  }
  func.func @transform_1(%arg0: i32) -> (i32, i32) {
    %c0_i32 = arith.constant 0 : i32
    %c0_i32_0 = arith.constant 0 : i32
    %c0_i32_1 = arith.constant 0 : i32
    return %c0_i32, %c0_i32_0 : i32, i32
  }
  func.func @transform_2(%arg0: i32) -> (i32, i32) {
    %c0_i32 = arith.constant 0 : i32
    %c0_i32_0 = arith.constant 0 : i32
    %c0_i32_1 = arith.constant 0 : i32
    return %c0_i32, %c0_i32_0 : i32, i32
  }
  func.func @transform_3(%arg0: i32) -> (i32, i32) {
    %c0_i32 = arith.constant 0 : i32
    %c0_i32_0 = arith.constant 0 : i32
    return %arg0, %c0_i32 : i32, i32
  }
}

</mosaic_0001>

<llo_original>
// kernel: aspp_forward.3
$region0: #{aspp_forward.3}
  #allocation0 [shape = 'u32[]', space=smem, size = 0x4, offset = 0x4, fixed_abs, tag = 'smem constant byte address 0x4 - core index']
  #allocation1 [shape = 'u32[144,128]{1,0:T(1,128)}', space=vmem, size = 0x12000, scoped, tag = 'internal scratch']
  %s0 = inlined_call_operand.vmem [shape: bf16[512,8], index: 0, kind: input, shape index: {}]
  %s1 = inlined_call_operand.vmem [shape: f32[1,8], index: 1, kind: input, shape index: {}]
  %s2 = inlined_call_operand.vmem [shape: f32[1,8], index: 2, kind: input, shape index: {}]
  %s3 = inlined_call_operand.vmem [shape: f32[512,8], index: 3, kind: output, shape index: {}]
  %s4 = sld [smem:[#allocation0]]
  $region45: #{aspp_forward.3} parent=0
    _
  %s6 = ssub.s32 1, %s4
  %s7 = scalar_select 0, %s6, %s4
  loop: start=0, step=1, limit=4
  $region2: #{aspp_forward.3} parent=0 // loop_pre_header
    _
  $region3: #{aspp_forward.3} parent=0 // loop_header
    %s9 = sphi 0, %s13
    %p10 = scmp.ge.s32.totalorder %s9, 4
    %s19 = sphi 0, %s21
    %s22 = sphi 0, %s19
    %s23 = sphi 0, %s22
    %s39 = sphi 0, %s23
    %s43 = sphi 0, %s43
    %s45 = sphi 0, %s43
    %s46 = sphi 0, %s45
    %s60 = sphi 0, %s46
    %s64 = sphi 0, %s64
    %s66 = sphi 0, %s64
    %s67 = sphi 0, %s66
    %s81 = sphi 0, %s67
    %s87 = sphi 0, %s89
    %s90 = sphi 0, %s87
    %s91 = sphi 0, %s90
    %s107 = sphi 0, %s91
  $region4: #{aspp_forward.3} parent=0 // loop_header_branch
    %12 = sbr.rel (%p10) target = $region8
  $region5: #{aspp_forward.3} parent=0 // loop_body
    %s14 = ssub.s32 %s9, 1
    %s15 = ssub.s32 %s9, 2
    %s16 = sadd.s32 %s9, 1
    %s17 = ssub.s32 %s9, %s16
    %p18 = scmp.eq.s32.totalorder %s17, 0
    %s20 = sadd.s32 %s19, 1
    %s21 = scalar_select %p18, %s19, %s20
    %p24 = pneg %p18
    %p25 = scmp.eq.s32.totalorder %s9, 1
    %p26 = por %p24, %p25
    %p27 = scmp.ne.s32.totalorder %s19, %s22
    %p28 = scmp.eq.s32.totalorder %s9, 0
    %p29 = por %p27, %p28
    %p30 = scmp.ne.s32.totalorder %s19, %s22
    %p31 = scmp.eq.s32.totalorder %s14, 1
    %p32 = por %p30, %p31
    %p33 = scmp.ne.s32.totalorder %s22, %s23
    %p34 = scmp.eq.s32.totalorder %s14, 0
    %p35 = por %p33, %p34
    %p36 = scmp.ne.s32.totalorder %s22, %s23
    %p37 = scmp.eq.s32.totalorder %s15, 1
    %p38 = por %p36, %p37
    %p40 = scmp.ne.s32.totalorder %s23, %s39
    %p41 = scmp.eq.s32.totalorder %s15, 0
    %p42 = por %p40, %p41
    %s44 = sadd.s32 %s43, 1
    %p47 = scmp.eq.s32.totalorder %s9, 1
    %p48 = scmp.ne.s32.totalorder %s43, %s45
    %p49 = scmp.eq.s32.totalorder %s9, 0
    %p50 = por %p48, %p49
    %p51 = scmp.ne.s32.totalorder %s43, %s45
    %p52 = scmp.eq.s32.totalorder %s14, 1
    %p53 = por %p51, %p52
    %p54 = scmp.ne.s32.totalorder %s45, %s46
    %p55 = scmp.eq.s32.totalorder %s14, 0
    %p56 = por %p54, %p55
    %p57 = scmp.ne.s32.totalorder %s45, %s46
    %p58 = scmp.eq.s32.totalorder %s15, 1
    %p59 = por %p57, %p58
    %p61 = scmp.ne.s32.totalorder %s46, %s60
    %p62 = scmp.eq.s32.totalorder %s15, 0
    %p63 = por %p61, %p62
    %s65 = sadd.s32 %s64, 1
    %p68 = scmp.eq.s32.totalorder %s9, 1
    %p69 = scmp.ne.s32.totalorder %s64, %s66
    %p70 = scmp.eq.s32.totalorder %s9, 0
    %p71 = por %p69, %p70
    %p72 = scmp.ne.s32.totalorder %s64, %s66
    %p73 = scmp.eq.s32.totalorder %s14, 1
    %p74 = por %p72, %p73
    %p75 = scmp.ne.s32.totalorder %s66, %s67
    %p76 = scmp.eq.s32.totalorder %s14, 0
    %p77 = por %p75, %p76
    %p78 = scmp.ne.s32.totalorder %s66, %s67
    %p79 = scmp.eq.s32.totalorder %s15, 1
    %p80 = por %p78, %p79
    %p82 = scmp.ne.s32.totalorder %s67, %s81
    %p83 = scmp.eq.s32.totalorder %s15, 0
    %p84 = por %p82, %p83
    %s85 = ssub.s32 %s9, %s16
    %p86 = scmp.eq.s32.totalorder %s85, 0
    %s88 = sadd.s32 %s87, 1
    %s89 = scalar_select %p86, %s87, %s88
    %p92 = pneg %p86
    %p93 = scmp.eq.s32.totalorder %s9, 1
    %p94 = por %p92, %p93
    %p95 = scmp.ne.s32.totalorder %s87, %s90
    %p96 = scmp.eq.s32.totalorder %s9, 0
    %p97 = por %p95, %p96
    %p98 = scmp.ne.s32.totalorder %s87, %s90
    %p99 = scmp.eq.s32.totalorder %s14, 1
    %p100 = por %p98, %p99
    %p101 = scmp.ne.s32.totalorder %s90, %s91
    %p102 = scmp.eq.s32.totalorder %s14, 0
    %p103 = por %p101, %p102
    %p104 = scmp.ne.s32.totalorder %s90, %s91
    %p105 = scmp.eq.s32.totalorder %s15, 1
    %p106 = por %p104, %p105
    %p108 = scmp.ne.s32.totalorder %s91, %s107
    %p109 = scmp.eq.s32.totalorder %s15, 0
    %p110 = por %p108, %p109
    %p111 = scmp.le.s32.totalorder 1, %s9
    %p112 = scmp.lt.s32.totalorder %s9, 3
    %p113 = pnand %p111, %p112
    %p114 = pneg %p113
    // Predicated region
    $region9: #{aspp_forward.3} parent=5 // pred_check
      _
    $region10: #{aspp_forward.3} parent=5 // pred_check_branch
      %116 = sbr.rel (%p113) target = $region12
    $region11: #{aspp_forward.3} parent=5 // pred_region
      %s117 = ssub.s32 %s9, 1
      // Predicated region
      $region13: #{aspp_forward.3} parent=11 // pred_check
        %p118 = pneg %p56
      $region14: #{aspp_forward.3} parent=11 // pred_check_branch
        %120 = sbr.rel (%p118) target = $region16
      $region15: #{aspp_forward.3} parent=11 // pred_region
        _
      $region16: #{aspp_forward.3} parent=11 // pred_fallthru
        _
      // Predicated region
      $region17: #{aspp_forward.3} parent=11 // pred_check
        %p121 = pneg %p77
      $region18: #{aspp_forward.3} parent=11 // pred_check_branch
        %123 = sbr.rel (%p121) target = $region20
      $region19: #{aspp_forward.3} parent=11 // pred_region
        _
      $region20: #{aspp_forward.3} parent=11 // pred_fallthru
        _
    $region12: #{aspp_forward.3} parent=5 // pred_fallthru
      _
    %p124 = scmp.lt.s32.totalorder %s9, 2
    // Predicated region
    $region21: #{aspp_forward.3} parent=5 // pred_check
      %p125 = pneg %p124
    $region22: #{aspp_forward.3} parent=5 // pred_check_branch
      %127 = sbr.rel (%p125) target = $region24
    $region23: #{aspp_forward.3} parent=5 // pred_region
      // Predicated region
      $region25: #{aspp_forward.3} parent=23 // pred_check
        %p128 = pneg %p29
      $region26: #{aspp_forward.3} parent=23 // pred_check_branch
        %130 = sbr.rel (%p128) target = $region28
      $region27: #{aspp_forward.3} parent=23 // pred_region
        %s131 = smul.u32 32, %s9
        %p132 = scmp.lt.s32.totalorder %s131, 63
        %s133 = scalar_select %p132, %s131, 63
        %s134 = smul.addr %s133, 4
        %s135 = scalar_lea.vmem %s0, %s134
        %s136 = smul.u32 32, %s9
      $region28: #{aspp_forward.3} parent=23 // pred_fallthru
        _
    $region24: #{aspp_forward.3} parent=5 // pred_fallthru
      _
    %p137 = scmp.le.s32.totalorder 1, %s9
    %p138 = scmp.lt.s32.totalorder %s9, 3
    %p139 = pnand %p137, %p138
    %p140 = pneg %p139
    // Predicated region
    $region29: #{aspp_forward.3} parent=5 // pred_check
      _
    $region30: #{aspp_forward.3} parent=5 // pred_check_branch
      %142 = sbr.rel (%p139) target = $region32
    $region31: #{aspp_forward.3} parent=5 // pred_region
      %s143 = ssub.s32 %s9, 1
      %s144 = smul.u32 32, %s14
      %p145 = scmp.lt.s32.totalorder %s144, 63
      %s146 = scalar_select %p145, %s144, 63
      %s147 = smul.addr %s146, 4
      %s148 = scalar_lea.vmem %s0, %s147
      %p149 = pneg %p35
      %p150 = pneg %p32
      %p151 = pneg %p56
      %p152 = pneg %p53
      %p153 = pneg %p77
      %p154 = pneg %p74
      %p155 = pneg %p103
      %p156 = pneg %p100
      %s157 = smul.u32 32, %s14
      %p158 = scmp.lt.s32.totalorder %s157, 63
      %s159 = scalar_select %p158, %s157, 63
      %s160 = smul.addr %s159, 8
      %s161 = scalar_lea.vmem %s3, %s160
      %s162 = smul.u32 32, %s14
      %p163 = scmp.lt.s32.totalorder %s162, 63
      %s164 = scalar_select %p163, %s162, 63
      %s165 = smul.addr %s164, 4
      %s166 = scalar_lea.vmem %s0, %s165
      %s167 = smul.u32 32, %s14
      %s168 = smul.u32 32, %s14
      %p169 = scmp.lt.s32.totalorder %s168, 63
      %s170 = scalar_select %p169, %s168, 63
      %s171 = smul.addr %s170, 8
      %s172 = scalar_lea.vmem %s3, %s171
      %s173 = smul.u32 32, %s14
      %v174 = vld [vmem:[%s166] sm:$0xf]
      %v175 = vld [vmem:[%s166 + $0x4] sm:$0xf]
      %v176 = vld [vmem:[%s166 + $0x8] sm:$0xf]
      %v177 = vld [vmem:[%s166 + $0xc] sm:$0xf]
      %v178 = vld [vmem:[%s166 + $0x10] sm:$0xf]
      %v179 = vld [vmem:[%s166 + $0x14] sm:$0xf]
      %v180 = vld [vmem:[%s166 + $0x18] sm:$0xf]
      %v181 = vld [vmem:[%s166 + $0x1c] sm:$0xf]
      %v182 = vld [vmem:[%s166 + $0x20] sm:$0xf]
      %v183 = vld [vmem:[%s166 + $0x24] sm:$0xf]
      %v184 = vld [vmem:[%s166 + $0x28] sm:$0xf]
      %v185 = vld [vmem:[%s166 + $0x2c] sm:$0xf]
      %v186 = vld [vmem:[%s166 + $0x30] sm:$0xf]
      %v187 = vld [vmem:[%s166 + $0x34] sm:$0xf]
      %v188 = vld [vmem:[%s166 + $0x38] sm:$0xf]
      %v189 = vld [vmem:[%s166 + $0x3c] sm:$0xf]
      %v190 = vld [vmem:[%s166 + $0x40] sm:$0xf]
      %v191 = vld [vmem:[%s166 + $0x44] sm:$0xf]
      %v192 = vld [vmem:[%s166 + $0x48] sm:$0xf]
      %v193 = vld [vmem:[%s166 + $0x4c] sm:$0xf]
      %v194 = vld [vmem:[%s166 + $0x50] sm:$0xf]
      %v195 = vld [vmem:[%s166 + $0x54] sm:$0xf]
      %v196 = vld [vmem:[%s166 + $0x58] sm:$0xf]
      %v197 = vld [vmem:[%s166 + $0x5c] sm:$0xf]
      %v198 = vld [vmem:[%s166 + $0x60] sm:$0xf]
      %v199 = vld [vmem:[%s166 + $0x64] sm:$0xf]
      %v200 = vld [vmem:[%s166 + $0x68] sm:$0xf]
      %v201 = vld [vmem:[%s166 + $0x6c] sm:$0xf]
      %v202 = vld [vmem:[%s166 + $0x70] sm:$0xf]
      %v203 = vld [vmem:[%s166 + $0x74] sm:$0xf]
      %v204 = vld [vmem:[%s166 + $0x78] sm:$0xf]
      %v205 = vld [vmem:[%s166 + $0x7c] sm:$0xf]
      %v206 = vunpack.c.l.bf16 %v174
      %v207 = vunpack.c.l.bf16 %v175
      %v208 = vunpack.c.l.bf16 %v176
      %v209 = vunpack.c.l.bf16 %v177
      %v210 = vunpack.c.l.bf16 %v178
      %v211 = vunpack.c.l.bf16 %v179
      %v212 = vunpack.c.l.bf16 %v180
      %v213 = vunpack.c.l.bf16 %v181
      %v214 = vunpack.c.l.bf16 %v182
      %v215 = vunpack.c.l.bf16 %v183
      %v216 = vunpack.c.l.bf16 %v184
      %v217 = vunpack.c.l.bf16 %v185
      %v218 = vunpack.c.l.bf16 %v186
      %v219 = vunpack.c.l.bf16 %v187
      %v220 = vunpack.c.l.bf16 %v188
      %v221 = vunpack.c.l.bf16 %v189
      %v222 = vunpack.c.l.bf16 %v190
      %v223 = vunpack.c.l.bf16 %v191
      %v224 = vunpack.c.l.bf16 %v192
      %v225 = vunpack.c.l.bf16 %v193
      %v226 = vunpack.c.l.bf16 %v194
      %v227 = vunpack.c.l.bf16 %v195
      %v228 = vunpack.c.l.bf16 %v196
      %v229 = vunpack.c.l.bf16 %v197
      %v230 = vunpack.c.l.bf16 %v198
      %v231 = vunpack.c.l.bf16 %v199
      %v232 = vunpack.c.l.bf16 %v200
      %v233 = vunpack.c.l.bf16 %v201
      %v234 = vunpack.c.l.bf16 %v202
      %v235 = vunpack.c.l.bf16 %v203
      %v236 = vunpack.c.l.bf16 %v204
      %v237 = vunpack.c.l.bf16 %v205
      %v238 = vld [vmem:[%s1] sm:$0x1]
      %v240 = vlaneseq
      %v241 = vshrl.u32 %v240, 7
      %v242 = vsub.s32 0, %v241
      %v243 = vrot.slane %v238, %v242
      %v245 = vmul.f32 %v206, %v243
      %v246 = vmul.f32 %v207, %v243
      %v247 = vmul.f32 %v208, %v243
      %v248 = vmul.f32 %v209, %v243
      %v249 = vmul.f32 %v210, %v243
      %v250 = vmul.f32 %v211, %v243
      %v251 = vmul.f32 %v212, %v243
      %v252 = vmul.f32 %v213, %v243
      %v253 = vmul.f32 %v214, %v243
      %v254 = vmul.f32 %v215, %v243
      %v255 = vmul.f32 %v216, %v243
      %v256 = vmul.f32 %v217, %v243
      %v257 = vmul.f32 %v218, %v243
      %v258 = vmul.f32 %v219, %v243
      %v259 = vmul.f32 %v220, %v243
      %v260 = vmul.f32 %v221, %v243
      %v261 = vmul.f32 %v222, %v243
      %v262 = vmul.f32 %v223, %v243
      %v263 = vmul.f32 %v224, %v243
      %v264 = vmul.f32 %v225, %v243
      %v265 = vmul.f32 %v226, %v243
      %v266 = vmul.f32 %v227, %v243
      %v267 = vmul.f32 %v228, %v243
      %v268 = vmul.f32 %v229, %v243
      %v269 = vmul.f32 %v230, %v243
      %v270 = vmul.f32 %v231, %v243
      %v271 = vmul.f32 %v232, %v243
      %v272 = vmul.f32 %v233, %v243
      %v273 = vmul.f32 %v234, %v243
      %v274 = vmul.f32 %v235, %v243
      %v275 = vmul.f32 %v236, %v243
      %v276 = vmul.f32 %v237, %v243
      %v277 = vld [vmem:[%s2] sm:$0x1]
      %v279 = vlaneseq
      %v280 = vshrl.u32 %v279, 7
      %v281 = vsub.s32 0, %v280
      %v282 = vrot.slane %v277, %v281
      %v284 = vadd.f32 %v245, %v282
      %v285 = vadd.f32 %v246, %v282
      %v286 = vadd.f32 %v247, %v282
      %v287 = vadd.f32 %v248, %v282
      %v288 = vadd.f32 %v249, %v282
      %v289 = vadd.f32 %v250, %v282
      %v290 = vadd.f32 %v251, %v282
      %v291 = vadd.f32 %v252, %v282
      %v292 = vadd.f32 %v253, %v282
      %v293 = vadd.f32 %v254, %v282
      %v294 = vadd.f32 %v255, %v282
      %v295 = vadd.f32 %v256, %v282
      %v296 = vadd.f32 %v257, %v282
      %v297 = vadd.f32 %v258, %v282
      %v298 = vadd.f32 %v259, %v282
      %v299 = vadd.f32 %v260, %v282
      %v300 = vadd.f32 %v261, %v282
      %v301 = vadd.f32 %v262, %v282
      %v302 = vadd.f32 %v263, %v282
      %v303 = vadd.f32 %v264, %v282
      %v304 = vadd.f32 %v265, %v282
      %v305 = vadd.f32 %v266, %v282
      %v306 = vadd.f32 %v267, %v282
      %v307 = vadd.f32 %v268, %v282
      %v308 = vadd.f32 %v269, %v282
      %v309 = vadd.f32 %v270, %v282
      %v310 = vadd.f32 %v271, %v282
      %v311 = vadd.f32 %v272, %v282
      %v312 = vadd.f32 %v273, %v282
      %v313 = vadd.f32 %v274, %v282
      %v314 = vadd.f32 %v275, %v282
      %v315 = vadd.f32 %v276, %v282
      %v316 = vmax.f32 %v284, 0.0
      %v317 = vmax.f32 %v285, 0.0
      %v318 = vmax.f32 %v286, 0.0
      %v319 = vmax.f32 %v287, 0.0
      %v320 = vmax.f32 %v288, 0.0
      %v321 = vmax.f32 %v289, 0.0
      %v322 = vmax.f32 %v290, 0.0
      %v323 = vmax.f32 %v291, 0.0
      %v324 = vmax.f32 %v292, 0.0
      %v325 = vmax.f32 %v293, 0.0
      %v326 = vmax.f32 %v294, 0.0
      %v327 = vmax.f32 %v295, 0.0
      %v328 = vmax.f32 %v296, 0.0
      %v329 = vmax.f32 %v297, 0.0
      %v330 = vmax.f32 %v298, 0.0
      %v331 = vmax.f32 %v299, 0.0
      %v332 = vmax.f32 %v300, 0.0
      %v333 = vmax.f32 %v301, 0.0
      %v334 = vmax.f32 %v302, 0.0
      %v335 = vmax.f32 %v303, 0.0
      %v336 = vmax.f32 %v304, 0.0
      %v337 = vmax.f32 %v305, 0.0
      %v338 = vmax.f32 %v306, 0.0
      %v339 = vmax.f32 %v307, 0.0
      %v340 = vmax.f32 %v308, 0.0
      %v341 = vmax.f32 %v309, 0.0
      %v342 = vmax.f32 %v310, 0.0
      %v343 = vmax.f32 %v311, 0.0
      %v344 = vmax.f32 %v312, 0.0
      %v345 = vmax.f32 %v313, 0.0
      %v346 = vmax.f32 %v314, 0.0
      %v347 = vmax.f32 %v315, 0.0
      %vm348 = vcmask 64512
      %349 = vst.msk [vmem:[%s172] sm:$0xff] %vm348, %v316
      %350 = vst.msk [vmem:[%s172 + $0x8] sm:$0xff] %vm348, %v317
      %351 = vst.msk [vmem:[%s172 + $0x10] sm:$0xff] %vm348, %v318
      %352 = vst.msk [vmem:[%s172 + $0x18] sm:$0xff] %vm348, %v319
      %353 = vst.msk [vmem:[%s172 + $0x20] sm:$0xff] %vm348, %v320
      %354 = vst.msk [vmem:[%s172 + $0x28] sm:$0xff] %vm348, %v321
      %355 = vst.msk [vmem:[%s172 + $0x30] sm:$0xff] %vm348, %v322
      %356 = vst.msk [vmem:[%s172 + $0x38] sm:$0xff] %vm348, %v323
      %357 = vst.msk [vmem:[%s172 + $0x40] sm:$0xff] %vm348, %v324
      %358 = vst.msk [vmem:[%s172 + $0x48] sm:$0xff] %vm348, %v325
      %359 = vst.msk [vmem:[%s172 + $0x50] sm:$0xff] %vm348, %v326
      %360 = vst.msk [vmem:[%s172 + $0x58] sm:$0xff] %vm348, %v327
      %361 = vst.msk [vmem:[%s172 + $0x60] sm:$0xff] %vm348, %v328
      %362 = vst.msk [vmem:[%s172 + $0x68] sm:$0xff] %vm348, %v329
      %363 = vst.msk [vmem:[%s172 + $0x70] sm:$0xff] %vm348, %v330
      %364 = vst.msk [vmem:[%s172 + $0x78] sm:$0xff] %vm348, %v331
      %365 = vst.msk [vmem:[%s172 + $0x80] sm:$0xff] %vm348, %v332
      %366 = vst.msk [vmem:[%s172 + $0x88] sm:$0xff] %vm348, %v333
      %367 = vst.msk [vmem:[%s172 + $0x90] sm:$0xff] %vm348, %v334
      %368 = vst.msk [vmem:[%s172 + $0x98] sm:$0xff] %vm348, %v335
      %369 = vst.msk [vmem:[%s172 + $0xa0] sm:$0xff] %vm348, %v336
      %370 = vst.msk [vmem:[%s172 + $0xa8] sm:$0xff] %vm348, %v337
      %371 = vst.msk [vmem:[%s172 + $0xb0] sm:$0xff] %vm348, %v338
      %372 = vst.msk [vmem:[%s172 + $0xb8] sm:$0xff] %vm348, %v339
      %373 = vst.msk [vmem:[%s172 + $0xc0] sm:$0xff] %vm348, %v340
      %374 = vst.msk [vmem:[%s172 + $0xc8] sm:$0xff] %vm348, %v341
      %375 = vst.msk [vmem:[%s172 + $0xd0] sm:$0xff] %vm348, %v342
      %376 = vst.msk [vmem:[%s172 + $0xd8] sm:$0xff] %vm348, %v343
      %377 = vst.msk [vmem:[%s172 + $0xe0] sm:$0xff] %vm348, %v344
      %378 = vst.msk [vmem:[%s172 + $0xe8] sm:$0xff] %vm348, %v345
      %379 = vst.msk [vmem:[%s172 + $0xf0] sm:$0xff] %vm348, %v346
      %380 = vst.msk [vmem:[%s172 + $0xf8] sm:$0xff] %vm348, %v347
      %s381 = smul.u32 32, %s14
      %p382 = scmp.lt.s32.totalorder %s381, 63
      %s383 = scalar_select %p382, %s381, 63
      %s384 = smul.addr %s383, 8
      %s385 = scalar_lea.vmem %s3, %s384
      // Predicated region
      $region33: #{aspp_forward.3} parent=31 // pred_check
        %p386 = pneg %p100
      $region34: #{aspp_forward.3} parent=31 // pred_check_branch
        %388 = sbr.rel (%p386) target = $region36
      $region35: #{aspp_forward.3} parent=31 // pred_region
        %s389 = smul.u32 32, %s14
      $region36: #{aspp_forward.3} parent=31 // pred_fallthru
        _
    $region32: #{aspp_forward.3} parent=5 // pred_fallthru
      _
    %p390 = scmp.le.s32.totalorder 2, %s9
    // Predicated region
    $region37: #{aspp_forward.3} parent=5 // pred_check
      %p391 = pneg %p390
    $region38: #{aspp_forward.3} parent=5 // pred_check_branch
      %393 = sbr.rel (%p391) target = $region40
    $region39: #{aspp_forward.3} parent=5 // pred_region
      %s394 = ssub.s32 %s9, 2
      // Predicated region
      $region41: #{aspp_forward.3} parent=39 // pred_check
        %p395 = pneg %p106
      $region42: #{aspp_forward.3} parent=39 // pred_check_branch
        %397 = sbr.rel (%p395) target = $region44
      $region43: #{aspp_forward.3} parent=39 // pred_region
        %s398 = smul.u32 32, %s15
        %p399 = scmp.lt.s32.totalorder %s398, 63
        %s400 = scalar_select %p399, %s398, 63
        %s401 = smul.addr %s400, 8
        %s402 = scalar_lea.vmem %s3, %s401
      $region44: #{aspp_forward.3} parent=39 // pred_fallthru
        _
    $region40: #{aspp_forward.3} parent=5 // pred_fallthru
      _
  $region6: #{aspp_forward.3} parent=0 // loop_footer
    %s13 = sadd.s32 1, %s9
  $region7: #{aspp_forward.3} parent=0 // loop_footer_branch
    %8 = sbr.rel target = $region3
  $region8: #{aspp_forward.3} parent=0 // loop_exit
    _

// kernel: aspp_forward.2
$region0: #{aspp_forward.2}
  #allocation0 [shape = 'u32[]', space=smem, size = 0x4, offset = 0x4, fixed_abs, tag = 'smem constant byte address 0x4 - core index']
  #allocation1 [shape = 'u32[144,128]{1,0:T(1,128)}', space=vmem, size = 0x12000, scoped, tag = 'internal scratch']
  #allocation2 [shape = 'f32[256,8]{1,0:T(8,128)}', space=vmem, size = 0x20000, scoped, tag = 'scratch operand']
  %s0 = inlined_call_operand.vmem [shape: bf16[6,16,20,4], index: 0, kind: input, shape index: {}]
  %s1 = inlined_call_operand.vmem [shape: bf16[3,3,4,8], index: 1, kind: input, shape index: {}]
  %s2 = inlined_call_operand.vmem [shape: f32[1,8], index: 2, kind: input, shape index: {}]
  %s3 = inlined_call_operand.vmem [shape: bf16[512,8], index: 3, kind: output, shape index: {0}]
  %s4 = inlined_call_operand.vmem [shape: f32[2,8,8], index: 4, kind: output, shape index: {1}]
  %5 = xla_tuple %s3, %s4
  %s6 = sld [smem:[#allocation0]]
  $region61: #{aspp_forward.2} parent=0
    _
  %s8 = ssub.s32 1, %s6
  %s9 = scalar_select 0, %s8, %s6
  loop: start=0, step=1, limit=8
  $region2: #{aspp_forward.2} parent=0 // loop_pre_header
    _
  $region3: #{aspp_forward.2} parent=0 // loop_header
    %s11 = sphi 0, %s15
    %p12 = scmp.ge.s32.totalorder %s11, 8
    %s18 = sphi 0, %s30
    %s19 = sphi 0, %s26
    %s20 = sphi 0, %s18
    %s21 = sphi 0, %s19
    %s22 = sphi 0, %s20
    %s23 = sphi 0, %s21
    %s37 = sphi 0, %s39
    %s40 = sphi 0, %s37
    %s41 = sphi 0, %s40
    %s57 = sphi 0, %s41
    %s63 = sphi 0, %s65
    %s66 = sphi 0, %s63
    %s67 = sphi 0, %s66
    %s83 = sphi 0, %s67
    %s87 = sphi 0, %s87
    %s89 = sphi 0, %s87
    %s90 = sphi 0, %s89
    %s104 = sphi 0, %s90
    %s110 = sphi 0, %s112
    %s113 = sphi 0, %s110
    %s114 = sphi 0, %s113
    %s130 = sphi 0, %s114
    %s136 = sphi 0, %s138
    %s139 = sphi 0, %s136
    %s140 = sphi 0, %s139
    %s156 = sphi 0, %s140
  $region4: #{aspp_forward.2} parent=0 // loop_header_branch
    %14 = sbr.rel (%p12) target = $region8
  $region5: #{aspp_forward.2} parent=0 // loop_body
    %s16 = ssub.s32 %s11, 1
    %s17 = ssub.s32 %s11, 2
    %s24 = sadd.s32 1, %s19
    %p25 = scmp.ge.s32.totalorder %s24, 3
    %s26 = scalar_select %p25, 0, %s24
    %s27 = sadd.s32 1, %s18
    %s28 = scalar_select %p25, %s27, %s18
    %p29 = scmp.ge.s32.totalorder %s28, 2
    %s30 = scalar_select %p29, 0, %s28
    %s31 = smul.u32 %s19, 2
    %s32 = sadd.s32 %s31, %s18
    %s33 = smul.u32 %s26, 2
    %s34 = sadd.s32 %s33, %s30
    %s35 = ssub.s32 %s32, %s34
    %p36 = scmp.eq.s32.totalorder %s35, 0
    %s38 = sadd.s32 %s37, 1
    %s39 = scalar_select %p36, %s37, %s38
    %p42 = pneg %p36
    %p43 = scmp.eq.s32.totalorder %s11, 5
    %p44 = por %p42, %p43
    %p45 = scmp.ne.s32.totalorder %s37, %s40
    %p46 = scmp.eq.s32.totalorder %s11, 0
    %p47 = por %p45, %p46
    %p48 = scmp.ne.s32.totalorder %s37, %s40
    %p49 = scmp.eq.s32.totalorder %s16, 5
    %p50 = por %p48, %p49
    %p51 = scmp.ne.s32.totalorder %s40, %s41
    %p52 = scmp.eq.s32.totalorder %s16, 0
    %p53 = por %p51, %p52
    %p54 = scmp.ne.s32.totalorder %s40, %s41
    %p55 = scmp.eq.s32.totalorder %s17, 5
    %p56 = por %p54, %p55
    %p58 = scmp.ne.s32.totalorder %s41, %s57
    %p59 = scmp.eq.s32.totalorder %s17, 0
    %p60 = por %p58, %p59
    %s61 = ssub.s32 %s19, %s26
    %p62 = scmp.eq.s32.totalorder %s61, 0
    %s64 = sadd.s32 %s63, 1
    %s65 = scalar_select %p62, %s63, %s64
    %p68 = pneg %p62
    %p69 = scmp.eq.s32.totalorder %s11, 5
    %p70 = por %p68, %p69
    %p71 = scmp.ne.s32.totalorder %s63, %s66
    %p72 = scmp.eq.s32.totalorder %s11, 0
    %p73 = por %p71, %p72
    %p74 = scmp.ne.s32.totalorder %s63, %s66
    %p75 = scmp.eq.s32.totalorder %s16, 5
    %p76 = por %p74, %p75
    %p77 = scmp.ne.s32.totalorder %s66, %s67
    %p78 = scmp.eq.s32.totalorder %s16, 0
    %p79 = por %p77, %p78
    %p80 = scmp.ne.s32.totalorder %s66, %s67
    %p81 = scmp.eq.s32.totalorder %s17, 5
    %p82 = por %p80, %p81
    %p84 = scmp.ne.s32.totalorder %s67, %s83
    %p85 = scmp.eq.s32.totalorder %s17, 0
    %p86 = por %p84, %p85
    %s88 = sadd.s32 %s87, 1
    %p91 = scmp.eq.s32.totalorder %s11, 5
    %p92 = scmp.ne.s32.totalorder %s87, %s89
    %p93 = scmp.eq.s32.totalorder %s11, 0
    %p94 = por %p92, %p93
    %p95 = scmp.ne.s32.totalorder %s87, %s89
    %p96 = scmp.eq.s32.totalorder %s16, 5
    %p97 = por %p95, %p96
    %p98 = scmp.ne.s32.totalorder %s89, %s90
    %p99 = scmp.eq.s32.totalorder %s16, 0
    %p100 = por %p98, %p99
    %p101 = scmp.ne.s32.totalorder %s89, %s90
    %p102 = scmp.eq.s32.totalorder %s17, 5
    %p103 = por %p101, %p102
    %p105 = scmp.ne.s32.totalorder %s90, %s104
    %p106 = scmp.eq.s32.totalorder %s17, 0
    %p107 = por %p105, %p106
    %s108 = ssub.s32 %s18, %s30
    %p109 = scmp.eq.s32.totalorder %s108, 0
    %s111 = sadd.s32 %s110, 1
    %s112 = scalar_select %p109, %s110, %s111
    %p115 = pneg %p109
    %p116 = scmp.eq.s32.totalorder %s11, 5
    %p117 = por %p115, %p116
    %p118 = scmp.ne.s32.totalorder %s110, %s113
    %p119 = scmp.eq.s32.totalorder %s11, 0
    %p120 = por %p118, %p119
    %p121 = scmp.ne.s32.totalorder %s110, %s113
    %p122 = scmp.eq.s32.totalorder %s16, 5
    %p123 = por %p121, %p122
    %p124 = scmp.ne.s32.totalorder %s113, %s114
    %p125 = scmp.eq.s32.totalorder %s16, 0
    %p126 = por %p124, %p125
    %p127 = scmp.ne.s32.totalorder %s113, %s114
    %p128 = scmp.eq.s32.totalorder %s17, 5
    %p129 = por %p127, %p128
    %p131 = scmp.ne.s32.totalorder %s114, %s130
    %p132 = scmp.eq.s32.totalorder %s17, 0
    %p133 = por %p131, %p132
    %s134 = ssub.s32 %s18, %s30
    %p135 = scmp.eq.s32.totalorder %s134, 0
    %s137 = sadd.s32 %s136, 1
    %s138 = scalar_select %p135, %s136, %s137
    %p141 = pneg %p135
    %p142 = scmp.eq.s32.totalorder %s11, 5
    %p143 = por %p141, %p142
    %p144 = scmp.ne.s32.totalorder %s136, %s139
    %p145 = scmp.eq.s32.totalorder %s11, 0
    %p146 = por %p144, %p145
    %p147 = scmp.ne.s32.totalorder %s136, %s139
    %p148 = scmp.eq.s32.totalorder %s16, 5
    %p149 = por %p147, %p148
    %p150 = scmp.ne.s32.totalorder %s139, %s140
    %p151 = scmp.eq.s32.totalorder %s16, 0
    %p152 = por %p150, %p151
    %p153 = scmp.ne.s32.totalorder %s139, %s140
    %p154 = scmp.eq.s32.totalorder %s17, 5
    %p155 = por %p153, %p154
    %p157 = scmp.ne.s32.totalorder %s140, %s156
    %p158 = scmp.eq.s32.totalorder %s17, 0
    %p159 = por %p157, %p158
    %p160 = scmp.le.s32.totalorder 1, %s11
    %p161 = scmp.lt.s32.totalorder %s11, 7
    %p162 = pnand %p160, %p161
    %p163 = pneg %p162
    // Predicated region
    $region9: #{aspp_forward.2} parent=5 // pred_check
      _
    $region10: #{aspp_forward.2} parent=5 // pred_check_branch
      %165 = sbr.rel (%p162) target = $region12
    $region11: #{aspp_forward.2} parent=5 // pred_region
      %s166 = ssub.s32 %s11, 1
      // Predicated region
      $region13: #{aspp_forward.2} parent=11 // pred_check
        %p167 = pneg %p100
      $region14: #{aspp_forward.2} parent=11 // pred_check_branch
        %169 = sbr.rel (%p167) target = $region16
      $region15: #{aspp_forward.2} parent=11 // pred_region
        _
      $region16: #{aspp_forward.2} parent=11 // pred_fallthru
        _
    $region12: #{aspp_forward.2} parent=5 // pred_fallthru
      _
    %p170 = scmp.lt.s32.totalorder %s11, 6
    // Predicated region
    $region17: #{aspp_forward.2} parent=5 // pred_check
      %p171 = pneg %p170
    $region18: #{aspp_forward.2} parent=5 // pred_check_branch
      %173 = sbr.rel (%p171) target = $region20
    $region19: #{aspp_forward.2} parent=5 // pred_region
      // Predicated region
      $region21: #{aspp_forward.2} parent=19 // pred_check
        %p174 = pneg %p47
      $region22: #{aspp_forward.2} parent=19 // pred_check_branch
        %176 = sbr.rel (%p174) target = $region24
      $region23: #{aspp_forward.2} parent=19 // pred_region
        %s177 = smul.u32 %s19, 2
        %s178 = sadd.s32 %s177, %s18
        %p179 = scmp.lt.s32.totalorder %s178, 5
        %s180 = scalar_select %p179, %s178, 5
        %s181 = smul.addr %s180, 48
        %s182 = smul.addr %s181, 4
        %s183 = scalar_lea.vmem %s0, %s182
        %s184 = smul.u32 %s19, 2
        %s185 = sadd.s32 %s184, %s18
      $region24: #{aspp_forward.2} parent=19 // pred_fallthru
        _
      // Predicated region
      $region25: #{aspp_forward.2} parent=19 // pred_check
        %p186 = pneg %p73
      $region26: #{aspp_forward.2} parent=19 // pred_check_branch
        %188 = sbr.rel (%p186) target = $region28
      $region27: #{aspp_forward.2} parent=19 // pred_region
        %p189 = scmp.lt.s32.totalorder %s19, 2
        %s190 = scalar_select %p189, %s19, 2
        %s191 = smul.addr %s190, 3
        %s192 = smul.addr %s191, 2
        %s193 = scalar_lea.vmem %s1, %s192
      $region28: #{aspp_forward.2} parent=19 // pred_fallthru
        _
    $region20: #{aspp_forward.2} parent=5 // pred_fallthru
      _
    %p194 = scmp.le.s32.totalorder 1, %s11
    %p195 = scmp.lt.s32.totalorder %s11, 7
    %p196 = pnand %p194, %p195
    %p197 = pneg %p196
    // Predicated region
    $region29: #{aspp_forward.2} parent=5 // pred_check
      _
    $region30: #{aspp_forward.2} parent=5 // pred_check_branch
      %199 = sbr.rel (%p196) target = $region32
    $region31: #{aspp_forward.2} parent=5 // pred_region
      %s200 = ssub.s32 %s11, 1
      %s201 = smul.u32 %s21, 2
      %s202 = sadd.s32 %s201, %s20
      %p203 = scmp.lt.s32.totalorder %s202, 5
      %s204 = scalar_select %p203, %s202, 5
      %s205 = smul.addr %s204, 48
      %s206 = smul.addr %s205, 4
      %s207 = scalar_lea.vmem %s0, %s206
      %p208 = pneg %p53
      %p209 = pneg %p50
      %p210 = scmp.lt.s32.totalorder %s21, 2
      %s211 = scalar_select %p210, %s21, 2
      %s212 = smul.addr %s211, 3
      %s213 = smul.addr %s212, 2
      %s214 = scalar_lea.vmem %s1, %s213
      %p215 = pneg %p79
      %p216 = pneg %p76
      %p217 = pneg %p100
      %p218 = pneg %p97
      %p219 = pneg %p126
      %p220 = pneg %p123
      %s221 = smul.u32 32, %s20
      %p222 = scmp.lt.s32.totalorder %s221, 63
      %s223 = scalar_select %p222, %s221, 63
      %s224 = smul.addr %s223, 4
      %s225 = scalar_lea.vmem %s3, %s224
      %p226 = pneg %p152
      %p227 = pneg %p149
      %p228 = scmp.lt.s32.totalorder %s20, 1
      %s229 = scalar_select %p228, %s20, 1
      %s230 = smul.addr %s229, 8
      %s231 = scalar_lea.vmem %s4, %s230
      %s232 = smul.u32 %s21, 2
      %s233 = sadd.s32 %s232, %s20
      %p234 = scmp.lt.s32.totalorder %s233, 5
      %s235 = scalar_select %p234, %s233, 5
      %s236 = smul.addr %s235, 48
      %s237 = smul.addr %s236, 4
      %s238 = scalar_lea.vmem %s0, %s237
      %s239 = smul.u32 %s21, 2
      %s240 = sadd.s32 %s239, %s20
      %p241 = scmp.lt.s32.totalorder %s21, 2
      %s242 = scalar_select %p241, %s21, 2
      %s243 = smul.addr %s242, 3
      %s244 = smul.addr %s243, 2
      %s245 = scalar_lea.vmem %s1, %s244
      %s246 = smul.u32 32, %s20
      %p247 = scmp.lt.s32.totalorder %s246, 63
      %s248 = scalar_select %p247, %s246, 63
      %s249 = smul.addr %s248, 4
      %s250 = scalar_lea.vmem %s3, %s249
      %s251 = smul.u32 32, %s20
      %p252 = scmp.lt.s32.totalorder %s20, 1
      %s253 = scalar_select %p252, %s20, 1
      %s254 = smul.addr %s253, 8
      %s255 = scalar_lea.vmem %s4, %s254
      %p257 = scmp.eq.s32.totalorder %s21, 0
      // Predicated region
      $region33: #{aspp_forward.2} parent=31 // pred_check
        %p258 = pneg %p257
      $region34: #{aspp_forward.2} parent=31 // pred_check_branch
        %260 = sbr.rel (%p258) target = $region36
      $region35: #{aspp_forward.2} parent=31 // pred_region
        %vm261 = vcmask 64512
        %262 = vst.msk [vmem:[#allocation2] sm:$0xff] %vm261, 0.0
        %263 = vst.msk [vmem:[#allocation2 + $0x8] sm:$0xff] %vm261, 0.0
        %264 = vst.msk [vmem:[#allocation2 + $0x10] sm:$0xff] %vm261, 0.0
        %265 = vst.msk [vmem:[#allocation2 + $0x18] sm:$0xff] %vm261, 0.0
        %266 = vst.msk [vmem:[#allocation2 + $0x20] sm:$0xff] %vm261, 0.0
        %267 = vst.msk [vmem:[#allocation2 + $0x28] sm:$0xff] %vm261, 0.0
        %268 = vst.msk [vmem:[#allocation2 + $0x30] sm:$0xff] %vm261, 0.0
        %269 = vst.msk [vmem:[#allocation2 + $0x38] sm:$0xff] %vm261, 0.0
        %270 = vst.msk [vmem:[#allocation2 + $0x40] sm:$0xff] %vm261, 0.0
        %271 = vst.msk [vmem:[#allocation2 + $0x48] sm:$0xff] %vm261, 0.0
        %272 = vst.msk [vmem:[#allocation2 + $0x50] sm:$0xff] %vm261, 0.0
        %273 = vst.msk [vmem:[#allocation2 + $0x58] sm:$0xff] %vm261, 0.0
        %274 = vst.msk [vmem:[#allocation2 + $0x60] sm:$0xff] %vm261, 0.0
        %275 = vst.msk [vmem:[#allocation2 + $0x68] sm:$0xff] %vm261, 0.0
        %276 = vst.msk [vmem:[#allocation2 + $0x70] sm:$0xff] %vm261, 0.0
        %277 = vst.msk [vmem:[#allocation2 + $0x78] sm:$0xff] %vm261, 0.0
        %278 = vst.msk [vmem:[#allocation2 + $0x80] sm:$0xff] %vm261, 0.0
        %279 = vst.msk [vmem:[#allocation2 + $0x88] sm:$0xff] %vm261, 0.0
        %280 = vst.msk [vmem:[#allocation2 + $0x90] sm:$0xff] %vm261, 0.0
        %281 = vst.msk [vmem:[#allocation2 + $0x98] sm:$0xff] %vm261, 0.0
        %282 = vst.msk [vmem:[#allocation2 + $0xa0] sm:$0xff] %vm261, 0.0
        %283 = vst.msk [vmem:[#allocation2 + $0xa8] sm:$0xff] %vm261, 0.0
        %284 = vst.msk [vmem:[#allocation2 + $0xb0] sm:$0xff] %vm261, 0.0
        %285 = vst.msk [vmem:[#allocation2 + $0xb8] sm:$0xff] %vm261, 0.0
        %286 = vst.msk [vmem:[#allocation2 + $0xc0] sm:$0xff] %vm261, 0.0
        %287 = vst.msk [vmem:[#allocation2 + $0xc8] sm:$0xff] %vm261, 0.0
        %288 = vst.msk [vmem:[#allocation2 + $0xd0] sm:$0xff] %vm261, 0.0
        %289 = vst.msk [vmem:[#allocation2 + $0xd8] sm:$0xff] %vm261, 0.0
        %290 = vst.msk [vmem:[#allocation2 + $0xe0] sm:$0xff] %vm261, 0.0
        %291 = vst.msk [vmem:[#allocation2 + $0xe8] sm:$0xff] %vm261, 0.0
        %292 = vst.msk [vmem:[#allocation2 + $0xf0] sm:$0xff] %vm261, 0.0
        %293 = vst.msk [vmem:[#allocation2 + $0xf8] sm:$0xff] %vm261, 0.0
      $region36: #{aspp_forward.2} parent=31 // pred_fallthru
        _
      %v294 = vld [vmem:[#allocation2] sm:$0xff]
      %v295 = vld [vmem:[#allocation2 + $0x8] sm:$0xff]
      %v296 = vld [vmem:[#allocation2 + $0x10] sm:$0xff]
      %v297 = vld [vmem:[#allocation2 + $0x18] sm:$0xff]
      %v298 = vld [vmem:[#allocation2 + $0x20] sm:$0xff]
      %v299 = vld [vmem:[#allocation2 + $0x28] sm:$0xff]
      %v300 = vld [vmem:[#allocation2 + $0x30] sm:$0xff]
      %v301 = vld [vmem:[#allocation2 + $0x38] sm:$0xff]
      %v302 = vld [vmem:[#allocation2 + $0x40] sm:$0xff]
      %v303 = vld [vmem:[#allocation2 + $0x48] sm:$0xff]
      %v304 = vld [vmem:[#allocation2 + $0x50] sm:$0xff]
      %v305 = vld [vmem:[#allocation2 + $0x58] sm:$0xff]
      %v306 = vld [vmem:[#allocation2 + $0x60] sm:$0xff]
      %v307 = vld [vmem:[#allocation2 + $0x68] sm:$0xff]
      %v308 = vld [vmem:[#allocation2 + $0x70] sm:$0xff]
      %v309 = vld [vmem:[#allocation2 + $0x78] sm:$0xff]
      %v310 = vld [vmem:[#allocation2 + $0x80] sm:$0xff]
      %v311 = vld [vmem:[#allocation2 + $0x88] sm:$0xff]
      %v312 = vld [vmem:[#allocation2 + $0x90] sm:$0xff]
      %v313 = vld [vmem:[#allocation2 + $0x98] sm:$0xff]
      %v314 = vld [vmem:[#allocation2 + $0xa0] sm:$0xff]
      %v315 = vld [vmem:[#allocation2 + $0xa8] sm:$0xff]
      %v316 = vld [vmem:[#allocation2 + $0xb0] sm:$0xff]
      %v317 = vld [vmem:[#allocation2 + $0xb8] sm:$0xff]
      %v318 = vld [vmem:[#allocation2 + $0xc0] sm:$0xff]
      %v319 = vld [vmem:[#allocation2 + $0xc8] sm:$0xff]
      %v320 = vld [vmem:[#allocation2 + $0xd0] sm:$0xff]
      %v321 = vld [vmem:[#allocation2 + $0xd8] sm:$0xff]
      %v322 = vld [vmem:[#allocation2 + $0xe0] sm:$0xff]
      %v323 = vld [vmem:[#allocation2 + $0xe8] sm:$0xff]
      %v324 = vld [vmem:[#allocation2 + $0xf0] sm:$0xff]
      %v325 = vld [vmem:[#allocation2 + $0xf8] sm:$0xff]
      %v326 = vld [vmem:[%s238] sm:$0xf]
      %v327 = vld [vmem:[%s238 + $0x4] sm:$0xf]
      %v328 = vld [vmem:[%s238 + $0xc] sm:$0xf]
      %v329 = vld [vmem:[%s238 + $0x10] sm:$0xf]
      %v330 = vld [vmem:[%s238 + $0x18] sm:$0xf]
      %v331 = vld [vmem:[%s238 + $0x1c] sm:$0xf]
      %v332 = vld [vmem:[%s238 + $0x24] sm:$0xf]
      %v333 = vld [vmem:[%s238 + $0x28] sm:$0xf]
      %v334 = vld [vmem:[%s238 + $0x30] sm:$0xf]
      %v335 = vld [vmem:[%s238 + $0x34] sm:$0xf]
      %v336 = vld [vmem:[%s238 + $0x3c] sm:$0xf]
      %v337 = vld [vmem:[%s238 + $0x40] sm:$0xf]
      %v338 = vld [vmem:[%s238 + $0x48] sm:$0xf]
      %v339 = vld [vmem:[%s238 + $0x4c] sm:$0xf]
      %v340 = vld [vmem:[%s238 + $0x54] sm:$0xf]
      %v341 = vld [vmem:[%s238 + $0x58] sm:$0xf]
      %v342 = vld [vmem:[%s238 + $0x60] sm:$0xf]
      %v343 = vld [vmem:[%s238 + $0x64] sm:$0xf]
      %v344 = vld [vmem:[%s238 + $0x6c] sm:$0xf]
      %v345 = vld [vmem:[%s238 + $0x70] sm:$0xf]
      %v346 = vld [vmem:[%s238 + $0x78] sm:$0xf]
      %v347 = vld [vmem:[%s238 + $0x7c] sm:$0xf]
      %v348 = vld [vmem:[%s238 + $0x84] sm:$0xf]
      %v349 = vld [vmem:[%s238 + $0x88] sm:$0xf]
      %v350 = vld [vmem:[%s238 + $0x90] sm:$0xf]
      %v351 = vld [vmem:[%s238 + $0x94] sm:$0xf]
      %v352 = vld [vmem:[%s238 + $0x9c] sm:$0xf]
      %v353 = vld [vmem:[%s238 + $0xa0] sm:$0xf]
      %v354 = vld [vmem:[%s238 + $0xa8] sm:$0xf]
      %v355 = vld [vmem:[%s238 + $0xac] sm:$0xf]
      %v356 = vld [vmem:[%s238 + $0xb4] sm:$0xf]
      %v357 = vld [vmem:[%s238 + $0xb8] sm:$0xf]
      %v358 = vld [vmem:[%s245] sm:$0x3]
      %v391 = vunpack.c.l.b16 %v326
      %v392 = vunpack.c.l.b16 %v327
      %v393 = vunpack.c.l.b16 %v328
      %v394 = vunpack.c.l.b16 %v329
      %v395 = vunpack.c.l.b16 %v330
      %v396 = vunpack.c.l.b16 %v331
      %v397 = vunpack.c.l.b16 %v332
      %v398 = vunpack.c.l.b16 %v333
      %v399 = vunpack.c.l.b16 %v334
      %v400 = vunpack.c.l.b16 %v335
      %v401 = vunpack.c.l.b16 %v336
      %v402 = vunpack.c.l.b16 %v337
      %v403 = vunpack.c.l.b16 %v338
      %v404 = vunpack.c.l.b16 %v339
      %v405 = vunpack.c.l.b16 %v340
      %v406 = vunpack.c.l.b16 %v341
      %v407 = vunpack.c.l.b16 %v342
      %v408 = vunpack.c.l.b16 %v343
      %v409 = vunpack.c.l.b16 %v344
      %v410 = vunpack.c.l.b16 %v345
      %v411 = vunpack.c.l.b16 %v346
      %v412 = vunpack.c.l.b16 %v347
      %v413 = vunpack.c.l.b16 %v348
      %v414 = vunpack.c.l.b16 %v349
      %v415 = vunpack.c.l.b16 %v350
      %v416 = vunpack.c.l.b16 %v351
      %v417 = vunpack.c.l.b16 %v352
      %v418 = vunpack.c.l.b16 %v353
      %v419 = vunpack.c.l.b16 %v354
      %v420 = vunpack.c.l.b16 %v355
      %v421 = vunpack.c.l.b16 %v356
      %v422 = vunpack.c.l.b16 %v357
      %v423 = vpack.c.b16 %v392, %v391
      %v424 = vpack.c.b16 %v394, %v393
      %v425 = vpack.c.b16 %v396, %v395
      %v426 = vpack.c.b16 %v398, %v397
      %v427 = vpack.c.b16 %v400, %v399
      %v428 = vpack.c.b16 %v402, %v401
      %v429 = vpack.c.b16 %v404, %v403
      %v430 = vpack.c.b16 %v406, %v405
      %v431 = vpack.c.b16 %v408, %v407
      %v432 = vpack.c.b16 %v410, %v409
      %v433 = vpack.c.b16 %v412, %v411
      %v434 = vpack.c.b16 %v414, %v413
      %v435 = vpack.c.b16 %v416, %v415
      %v436 = vpack.c.b16 %v418, %v417
      %v437 = vpack.c.b16 %v420, %v419
      %v438 = vpack.c.b16 %v422, %v421
      %vm439 = vcmask 31744
      %v441 = vsel %vm439, %v423, 0
      %v444 = vsel %vm439, %v424, 0
      %v447 = vsel %vm439, %v425, 0
      %v450 = vsel %vm439, %v426, 0
      %v453 = vsel %vm439, %v427, 0
      %v456 = vsel %vm439, %v428, 0
      %v459 = vsel %vm439, %v429, 0
      %v462 = vsel %vm439, %v430, 0
      %v465 = vsel %vm439, %v431, 0
      %v468 = vsel %vm439, %v432, 0
      %v471 = vsel %vm439, %v433, 0
      %v474 = vsel %vm439, %v434, 0
      %v477 = vsel %vm439, %v435, 0
      %v480 = vsel %vm439, %v436, 0
      %v483 = vsel %vm439, %v437, 0
      %v486 = vsel %vm439, %v438, 0
      %vm488 = vcmask 1041408
      %v490 = vsel %vm488, %v358, 0
      %492 = vmatprep.subr.bf16.mxu0 0
      %493 = vmatpush1.bf16.msra.mxu0 %v490
      %494 = vmatprep.subr.bf16.mxu0 0
      %495 = vmatpush1.bf16.msra.mxu0 0
      %496 = vmatprep.subr.bf16.mxu0 0
      %497 = vmatpush1.bf16.msra.mxu0 0
      %498 = vmatprep.subr.bf16.mxu0 0
      %499 = vmatpush1.bf16.msra.mxu0 0
      %500 = vmatprep.subr.bf16.mxu0 0
      %501 = vmatpush1.bf16.msra.mxu0 0
      %502 = vmatprep.subr.bf16.mxu0 0
      %503 = vmatpush1.bf16.msra.mxu0 0
      %504 = vmatprep.subr.bf16.mxu0 0
      %505 = vmatpush1.bf16.msra.mxu0 0
      %506 = vmatprep.subr.bf16.mxu0 0
      %507 = vmatpush1.bf16.msra.mxu0 0
      %508 = vmatprep.subr.bf16.mxu0 0
      %509 = vmatpush1.bf16.msra.mxu0 0
      %510 = vmatprep.subr.bf16.mxu0 0
      %511 = vmatpush1.bf16.msra.mxu0 0
      %512 = vmatprep.subr.bf16.mxu0 0
      %513 = vmatpush1.bf16.msra.mxu0 0
      %514 = vmatprep.subr.bf16.mxu0 0
      %515 = vmatpush1.bf16.msra.mxu0 0
      %516 = vmatprep.subr.bf16.mxu0 0
      %517 = vmatpush1.bf16.msra.mxu0 0
      %518 = vmatprep.subr.bf16.mxu0 0
      %519 = vmatpush1.bf16.msra.mxu0 0
      %520 = vmatprep.subr.bf16.mxu0 0
      %521 = vmatpush1.bf16.msra.mxu0 0
      %522 = vmatprep.subr.bf16.mxu0 0
      %523 = vmatpush1.bf16.msra.mxu0 0
      %524 = vmatprep.mubr.bf16.mxu0 0
      %525 = vmatmul.mubr.bf16.gmra.mrb[0].mxu0 %v441
      %v526 = vpop.f32.mrb[0].mxu0
      %v527 = vadd.f32 0.0, %v526
      %v528 = vpop.f32.mrb[0].mxu0
      %v529 = vpop.f32.mrb[0].mxu0
      %v530 = vadd.f32 0.0, %v529
      %v531 = vpop.f32.mrb[0].mxu0
      %532 = vmatprep.mubr.bf16.mxu0 0
      %533 = vmatmul.mubr.bf16.gmra.mrb[0].mxu0 %v444
      %v534 = vpop.f32.mrb[0].mxu0
      %v535 = vadd.f32 0.0, %v534
      %v536 = vpop.f32.mrb[0].mxu0
      %v537 = vpop.f32.mrb[0].mxu0
      %v538 = vadd.f32 0.0, %v537
      %v539 = vpop.f32.mrb[0].mxu0
      %540 = vmatprep.mubr.bf16.mxu0 0
      %541 = vmatmul.mubr.bf16.gmra.mrb[0].mxu0 %v447
      %v542 = vpop.f32.mrb[0].mxu0
      %v543 = vadd.f32 0.0, %v542
      %v544 = vpop.f32.mrb[0].mxu0
      %v545 = vpop.f32.mrb[0].mxu0
      %v546 = vadd.f32 0.0, %v545
      %v547 = vpop.f32.mrb[0].mxu0
      %548 = vmatprep.mubr.bf16.mxu0 0
      %549 = vmatmul.mubr.bf16.gmra.mrb[0].mxu0 %v450
      %v550 = vpop.f32.mrb[0].mxu0
      %v551 = vadd.f32 0.0, %v550
      %v552 = vpop.f32.mrb[0].mxu0
      %v553 = vpop.f32.mrb[0].mxu0
      %v554 = vadd.f32 0.0, %v553
      %v555 = vpop.f32.mrb[0].mxu0
      %556 = vmatprep.mubr.bf16.mxu0 0
      %557 = vmatmul.mubr.bf16.gmra.mrb[0].mxu0 %v453
      %v558 = vpop.f32.mrb[0].mxu0
      %v559 = vadd.f32 0.0, %v558
      %v560 = vpop.f32.mrb[0].mxu0
      %v561 = vpop.f32.mrb[0].mxu0
      %v562 = vadd.f32 0.0, %v561
      %v563 = vpop.f32.mrb[0].mxu0
      %564 = vmatprep.mubr.bf16.mxu0 0
      %565 = vmatmul.mubr.bf16.gmra.mrb[0].mxu0 %v456
      %v566 = vpop.f32.mrb[0].mxu0
      %v567 = vadd.f32 0.0, %v566
      %v568 = vpop.f32.mrb[0].mxu0
      %v569 = vpop.f32.mrb[0].mxu0
      %v570 = vadd.f32 0.0, %v569
      %v571 = vpop.f32.mrb[0].mxu0
      %572 = vmatprep.mubr.bf16.mxu0 0
      %573 = vmatmul.mubr.bf16.gmra.mrb[0].mxu0 %v459
      %v574 = vpop.f32.mrb[0].mxu0
      %v575 = vadd.f32 0.0, %v574
      %v576 = vpop.f32.mrb[0].mxu0
      %v577 = vpop.f32.mrb[0].mxu0
      %v578 = vadd.f32 0.0, %v577
      %v579 = vpop.f32.mrb[0].mxu0
      %580 = vmatprep.mubr.bf16.mxu0 0
      %581 = vmatmul.mubr.bf16.gmra.mrb[0].mxu0 %v462
      %v582 = vpop.f32.mrb[0].mxu0
      %v583 = vadd.f32 0.0, %v582
      %v584 = vpop.f32.mrb[0].mxu0
      %v585 = vpop.f32.mrb[0].mxu0
      %v586 = vadd.f32 0.0, %v585
      %v587 = vpop.f32.mrb[0].mxu0
      %588 = vmatprep.mubr.bf16.mxu0 0
      %589 = vmatmul.mubr.bf16.gmra.mrb[0].mxu0 %v465
      %v590 = vpop.f32.mrb[0].mxu0
      %v591 = vadd.f32 0.0, %v590
      %v592 = vpop.f32.mrb[0].mxu0
      %v593 = vpop.f32.mrb[0].mxu0
      %v594 = vadd.f32 0.0, %v593
      %v595 = vpop.f32.mrb[0].mxu0
      %596 = vmatprep.mubr.bf16.mxu0 0
      %597 = vmatmul.mubr.bf16.gmra.mrb[0].mxu0 %v468
      %v598 = vpop.f32.mrb[0].mxu0
      %v599 = vadd.f32 0.0, %v598
      %v600 = vpop.f32.mrb[0].mxu0
      %v601 = vpop.f32.mrb[0].mxu0
      %v602 = vadd.f32 0.0, %v601
      %v603 = vpop.f32.mrb[0].mxu0
      %604 = vmatprep.mubr.bf16.mxu0 0
      %605 = vmatmul.mubr.bf16.gmra.mrb[0].mxu0 %v471
      %v606 = vpop.f32.mrb[0].mxu0
      %v607 = vadd.f32 0.0, %v606
      %v608 = vpop.f32.mrb[0].mxu0
      %v609 = vpop.f32.mrb[0].mxu0
      %v610 = vadd.f32 0.0, %v609
      %v611 = vpop.f32.mrb[0].mxu0
      %612 = vmatprep.mubr.bf16.mxu0 0
      %613 = vmatmul.mubr.bf16.gmra.mrb[0].mxu0 %v474
      %v614 = vpop.f32.mrb[0].mxu0
      %v615 = vadd.f32 0.0, %v614
      %v616 = vpop.f32.mrb[0].mxu0
      %v617 = vpop.f32.mrb[0].mxu0
      %v618 = vadd.f32 0.0, %v617
      %v619 = vpop.f32.mrb[0].mxu0
      %620 = vmatprep.mubr.bf16.mxu0 0
      %621 = vmatmul.mubr.bf16.gmra.mrb[0].mxu0 %v477
      %v622 = vpop.f32.mrb[0].mxu0
      %v623 = vadd.f32 0.0, %v622
      %v624 = vpop.f32.mrb[0].mxu0
      %v625 = vpop.f32.mrb[0].mxu0
      %v626 = vadd.f32 0.0, %v625
      %v627 = vpop.f32.mrb[0].mxu0
      %628 = vmatprep.mubr.bf16.mxu0 0
      %629 = vmatmul.mubr.bf16.gmra.mrb[0].mxu0 %v480
      %v630 = vpop.f32.mrb[0].mxu0
      %v631 = vadd.f32 0.0, %v630
      %v632 = vpop.f32.mrb[0].mxu0
      %v633 = vpop.f32.mrb[0].mxu0
      %v634 = vadd.f32 0.0, %v633
      %v635 = vpop.f32.mrb[0].mxu0
      %636 = vmatprep.mubr.bf16.mxu0 0
      %637 = vmatmul.mubr.bf16.gmra.mrb[0].mxu0 %v483
      %v638 = vpop.f32.mrb[0].mxu0
      %v639 = vadd.f32 0.0, %v638
      %v640 = vpop.f32.mrb[0].mxu0
      %v641 = vpop.f32.mrb[0].mxu0
      %v642 = vadd.f32 0.0, %v641
      %v643 = vpop.f32.mrb[0].mxu0
      %644 = vmatprep.mubr.bf16.mxu0 0
      %645 = vmatmul.mubr.bf16.gmra.mrb[0].mxu0 %v486
      %v646 = vpop.f32.mrb[0].mxu0
      %v647 = vadd.f32 0.0, %v646
      %v648 = vpop.f32.mrb[0].mxu0
      %v649 = vpop.f32.mrb[0].mxu0
      %v650 = vadd.f32 0.0, %v649
      %v651 = vpop.f32.mrb[0].mxu0
      %652 = vdwg.mxu0
      %v653 = vadd.f32 %v294, %v527
      %v654 = vadd.f32 %v295, %v530
      %v655 = vadd.f32 %v296, %v535
      %v656 = vadd.f32 %v297, %v538
      %v657 = vadd.f32 %v298, %v543
      %v658 = vadd.f32 %v299, %v546
      %v659 = vadd.f32 %v300, %v551
      %v660 = vadd.f32 %v301, %v554
      %v661 = vadd.f32 %v302, %v559
      %v662 = vadd.f32 %v303, %v562
      %v663 = vadd.f32 %v304, %v567
      %v664 = vadd.f32 %v305, %v570
      %v665 = vadd.f32 %v306, %v575
      %v666 = vadd.f32 %v307, %v578
      %v667 = vadd.f32 %v308, %v583
      %v668 = vadd.f32 %v309, %v586
      %v669 = vadd.f32 %v310, %v591
      %v670 = vadd.f32 %v311, %v594
      %v671 = vadd.f32 %v312, %v599
      %v672 = vadd.f32 %v313, %v602
      %v673 = vadd.f32 %v314, %v607
      %v674 = vadd.f32 %v315, %v610
      %v675 = vadd.f32 %v316, %v615
      %v676 = vadd.f32 %v317, %v618
      %v677 = vadd.f32 %v318, %v623
      %v678 = vadd.f32 %v319, %v626
      %v679 = vadd.f32 %v320, %v631
      %v680 = vadd.f32 %v321, %v634
      %v681 = vadd.f32 %v322, %v639
      %v682 = vadd.f32 %v323, %v642
      %v683 = vadd.f32 %v324, %v647
      %v684 = vadd.f32 %v325, %v650
      %v685 = vld [vmem:[%s238] sm:$0xe]
      %v686 = vld [vmem:[%s238 + $0x4] sm:$0xf]
      %v687 = vld [vmem:[%s238 + $0x8] sm:$0x1]
      %v688 = vld [vmem:[%s238 + $0xc] sm:$0xe]
      %v689 = vld [vmem:[%s238 + $0x10] sm:$0xf]
      %v690 = vld [vmem:[%s238 + $0x14] sm:$0x1]
      %v691 = vld [vmem:[%s238 + $0x18] sm:$0xe]
      %v692 = vld [vmem:[%s238 + $0x1c] sm:$0xf]
      %v693 = vld [vmem:[%s238 + $0x20] sm:$0x1]
      %v694 = vld [vmem:[%s238 + $0x24] sm:$0xe]
      %v695 = vld [vmem:[%s238 + $0x28] sm:$0xf]
      %v696 = vld [vmem:[%s238 + $0x2c] sm:$0x1]
      %v697 = vld [vmem:[%s238 + $0x30] sm:$0xe]
      %v698 = vld [vmem:[%s238 + $0x34] sm:$0xf]
      %v699 = vld [vmem:[%s238 + $0x38] sm:$0x1]
      %v700 = vld [vmem:[%s238 + $0x3c] sm:$0xe]
      %v701 = vld [vmem:[%s238 + $0x40] sm:$0xf]
      %v702 = vld [vmem:[%s238 + $0x44] sm:$0x1]
      %v703 = vld [vmem:[%s238 + $0x48] sm:$0xe]
      %v704 = vld [vmem:[%s238 + $0x4c] sm:$0xf]
      %v705 = vld [vmem:[%s238 + $0x50] sm:$0x1]
      %v706 = vld [vmem:[%s238 + $0x54] sm:$0xe]
      %v707 = vld [vmem:[%s238 + $0x58] sm:$0xf]
      %v708 = vld [vmem:[%s238 + $0x5c] sm:$0x1]
      %v709 = vld [vmem:[%s238 + $0x60] sm:$0xe]
      %v710 = vld [vmem:[%s238 + $0x64] sm:$0xf]
      %v711 = vld [vmem:[%s238 + $0x68] sm:$0x1]
      %v712 = vld [vmem:[%s238 + $0x6c] sm:$0xe]
      %v713 = vld [vmem:[%s238 + $0x70] sm:$0xf]
      %v714 = vld [vmem:[%s238 + $0x74] sm:$0x1]
      %v715 = vld [vmem:[%s238 + $0x78] sm:$0xe]
      %v716 = vld [vmem:[%s238 + $0x7c] sm:$0xf]
      %v717 = vld [vmem:[%s238 + $0x80] sm:$0x1]
      %v718 = vld [vmem:[%s238 + $0x84] sm:$0xe]
      %v719 = vld [vmem:[%s238 + $0x88] sm:$0xf]
      %v720 = vld [vmem:[%s238 + $0x8c] sm:$0x1]
      %v721 = vld [vmem:[%s238 + $0x90] sm:$0xe]
      %v722 = vld [vmem:[%s238 + $0x94] sm:$0xf]
      %v723 = vld [vmem:[%s238 + $0x98] sm:$0x1]
      %v724 = vld [vmem:[%s238 + $0x9c] sm:$0xe]
      %v725 = vld [vmem:[%s238 + $0xa0] sm:$0xf]
      %v726 = vld [vmem:[%s238 + $0xa4] sm:$0x1]
      %v727 = vld [vmem:[%s238 + $0xa8] sm:$0xe]
      %v728 = vld [vmem:[%s238 + $0xac] sm:$0xf]
      %v729 = vld [vmem:[%s238 + $0xb0] sm:$0x1]
      %v730 = vld [vmem:[%s238 + $0xb4] sm:$0xe]
      %v731 = vld [vmem:[%s238 + $0xb8] sm:$0xf]
      %v732 = vld [vmem:[%s238 + $0xbc] sm:$0x1]
      %vm781 = vcmask 1042432
      %vm782 = vcmask 1046532
      %vm783 = vmor %vm781, %vm782
      %v784 = vrot.slane %v685, 5
      %v785 = vrot.slane %v784, 4
      %v786 = vrot.slane %v686, 5
      %v787 = vsel %vm783, %v785, %v786
      %v788 = vrot.slane %v786, 4
      %v789 = vrot.slane %v687, 5
      %v790 = vsel %vm783, %v788, %v789
      %v791 = vrot.slane %v688, 5
      %v792 = vrot.slane %v791, 4
      %v793 = vrot.slane %v689, 5
      %v794 = vsel %vm783, %v792, %v793
      %v795 = vrot.slane %v793, 4
      %v796 = vrot.slane %v690, 5
      %v797 = vsel %vm783, %v795, %v796
      %v798 = vrot.slane %v691, 5
      %v799 = vrot.slane %v798, 4
      %v800 = vrot.slane %v692, 5
      %v801 = vsel %vm783, %v799, %v800
      %v802 = vrot.slane %v800, 4
      %v803 = vrot.slane %v693, 5
      %v804 = vsel %vm783, %v802, %v803
      %v805 = vrot.slane %v694, 5
      %v806 = vrot.slane %v805, 4
      %v807 = vrot.slane %v695, 5
      %v808 = vsel %vm783, %v806, %v807
      %v809 = vrot.slane %v807, 4
      %v810 = vrot.slane %v696, 5
      %v811 = vsel %vm783, %v809, %v810
      %v812 = vrot.slane %v697, 5
      %v813 = vrot.slane %v812, 4
      %v814 = vrot.slane %v698, 5
      %v815 = vsel %vm783, %v813, %v814
      %v816 = vrot.slane %v814, 4
      %v817 = vrot.slane %v699, 5
      %v818 = vsel %vm783, %v816, %v817
      %v819 = vrot.slane %v700, 5
      %v820 = vrot.slane %v819, 4
      %v821 = vrot.slane %v701, 5
      %v822 = vsel %vm783, %v820, %v821
      %v823 = vrot.slane %v821, 4
      %v824 = vrot.slane %v702, 5
      %v825 = vsel %vm783, %v823, %v824
      %v826 = vrot.slane %v703, 5
      %v827 = vrot.slane %v826, 4
      %v828 = vrot.slane %v704, 5
      %v829 = vsel %vm783, %v827, %v828
      %v830 = vrot.slane %v828, 4
      %v831 = vrot.slane %v705, 5
      %v832 = vsel %vm783, %v830, %v831
      %v833 = vrot.slane %v706, 5
      %v834 = vrot.slane %v833, 4
      %v835 = vrot.slane %v707, 5
      %v836 = vsel %vm783, %v834, %v835
      %v837 = vrot.slane %v835, 4
      %v838 = vrot.slane %v708, 5
      %v839 = vsel %vm783, %v837, %v838
      %v840 = vrot.slane %v709, 5
      %v841 = vrot.slane %v840, 4
      %v842 = vrot.slane %v710, 5
      %v843 = vsel %vm783, %v841, %v842
      %v844 = vrot.slane %v842, 4
      %v845 = vrot.slane %v711, 5
      %v846 = vsel %vm783, %v844, %v845
      %v847 = vrot.slane %v712, 5
      %v848 = vrot.slane %v847, 4
      %v849 = vrot.slane %v713, 5
      %v850 = vsel %vm783, %v848, %v849
      %v851 = vrot.slane %v849, 4
      %v852 = vrot.slane %v714, 5
      %v853 = vsel %vm783, %v851, %v852
      %v854 = vrot.slane %v715, 5
      %v855 = vrot.slane %v854, 4
      %v856 = vrot.slane %v716, 5
      %v857 = vsel %vm783, %v855, %v856
      %v858 = vrot.slane %v856, 4
      %v859 = vrot.slane %v717, 5
      %v860 = vsel %vm783, %v858, %v859
      %v861 = vrot.slane %v718, 5
      %v862 = vrot.slane %v861, 4
      %v863 = vrot.slane %v719, 5
      %v864 = vsel %vm783, %v862, %v863
      %v865 = vrot.slane %v863, 4
      %v866 = vrot.slane %v720, 5
      %v867 = vsel %vm783, %v865, %v866
      %v868 = vrot.slane %v721, 5
      %v869 = vrot.slane %v868, 4
      %v870 = vrot.slane %v722, 5
      %v871 = vsel %vm783, %v869, %v870
      %v872 = vrot.slane %v870, 4
      %v873 = vrot.slane %v723, 5
      %v874 = vsel %vm783, %v872, %v873
      %v875 = vrot.slane %v724, 5
      %v876 = vrot.slane %v875, 4
      %v877 = vrot.slane %v725, 5
      %v878 = vsel %vm783, %v876, %v877
      %v879 = vrot.slane %v877, 4
      %v880 = vrot.slane %v726, 5
      %v881 = vsel %vm783, %v879, %v880
      %v882 = vrot.slane %v727, 5
      %v883 = vrot.slane %v882, 4
      %v884 = vrot.slane %v728, 5
      %v885 = vsel %vm783, %v883, %v884
      %v886 = vrot.slane %v884, 4
      %v887 = vrot.slane %v729, 5
      %v888 = vsel %vm783, %v886, %v887
      %v889 = vrot.slane %v730, 5
      %v890 = vrot.slane %v889, 4
      %v891 = vrot.slane %v731, 5
      %v892 = vsel %vm783, %v890, %v891
      %v893 = vrot.slane %v891, 4
      %v894 = vrot.slane %v732, 5
      %v895 = vsel %vm783, %v893, %v894
      %s896 = scalar_lea.vmem %s245, 2
      %v897 = vld [vmem:[%s896] sm:$0x3]
      %v898 = vunpack.c.l.b16 %v787
      %v899 = vunpack.c.l.b16 %v790
      %v900 = vunpack.c.l.b16 %v794
      %v901 = vunpack.c.l.b16 %v797
      %v902 = vunpack.c.l.b16 %v801
      %v903 = vunpack.c.l.b16 %v804
      %v904 = vunpack.c.l.b16 %v808
      %v905 = vunpack.c.l.b16 %v811
      %v906 = vunpack.c.l.b16 %v815
      %v907 = vunpack.c.l.b16 %v818
      %v908 = vunpack.c.l.b16 %v822
      %v909 = vunpack.c.l.b16 %v825
      %v910 = vunpack.c.l.b16 %v829
      %v911 = vunpack.c.l.b16 %v832
      %v912 = vunpack.c.l.b16 %v836
      %v913 = vunpack.c.l.b16 %v839
      %v914 = vunpack.c.l.b16 %v843
      %v915 = vunpack.c.l.b16 %v846
      %v916 = vunpack.c.l.b16 %v850
      %v917 = vunpack.c.l.b16 %v853
      %v918 = vunpack.c.l.b16 %v857
      %v919 = vunpack.c.l.b16 %v860
      %v920 = vunpack.c.l.b16 %v864
      %v921 = vunpack.c.l.b16 %v867
      %v922 = vunpack.c.l.b16 %v871
      %v923 = vunpack.c.l.b16 %v874
      %v924 = vunpack.c.l.b16 %v878
      %v925 = vunpack.c.l.b16 %v881
      %v926 = vunpack.c.l.b16 %v885
      %v927 = vunpack.c.l.b16 %v888
      %v928 = vunpack.c.l.b16 %v892
      %v929 = vunpack.c.l.b16 %v895
      %v930 = vpack.c.b16 %v899, %v898
      %v931 = vpack.c.b16 %v901, %v900
      %v932 = vpack.c.b16 %v903, %v902
      %v933 = vpack.c.b16 %v905, %v904
      %v934 = vpack.c.b16 %v907, %v906
      %v935 = vpack.c.b16 %v909, %v908
      %v936 = vpack.c.b16 %v911, %v910
      %v937 = vpack.c.b16 %v913, %v912
      %v938 = vpack.c.b16 %v915, %v914
      %v939 = vpack.c.b16 %v917, %v916
      %v940 = vpack.c.b16 %v919, %v918
      %v941 = vpack.c.b16 %v921, %v920
      %v942 = vpack.c.b16 %v923, %v922
      %v943 = vpack.c.b16 %v925, %v924
      %v944 = vpack.c.b16 %v927, %v926
      %v945 = vpack.c.b16 %v929, %v928
      %v947 = vsel %vm439, %v930, 0
      %v950 = vsel %vm439, %v931, 0
      %v953 = vsel %vm439, %v932, 0
      %v956 = vsel %vm439, %v933, 0
      %v959 = vsel %vm439, %v934, 0
      %v962 = vsel %vm439, %v935, 0
      %v965 = vsel %vm439, %v936, 0
      %v968 = vsel %vm439, %v937, 0
      %v971 = vsel %vm439, %v938, 0
      %v974 = vsel %vm439, %v939, 0
      %v977 = vsel %vm439, %v940, 0
      %v980 = vsel %vm439, %v941, 0
      %v983 = vsel %vm439, %v942, 0
      %v986 = vsel %vm439, %v943, 0
      %v989 = vsel %vm439, %v944, 0
      %v992 = vsel %vm439, %v945, 0
      %v995 = vsel %vm488, %v897, 0
      %997 = vmatprep.subr.bf16.mxu0 0
      %998 = vmatpush1.bf16.msra.mxu0 %v995
      %999 = vmatprep.subr.bf16.mxu0 0
      %1000 = vmatpush1.bf16.msra.mxu0 0
      %1001 = vmatprep.subr.bf16.mxu0 0
      %1002 = vmatpush1.bf16.msra.mxu0 0
      %1003 = vmatprep.subr.bf16.mxu0 0
      %1004 = vmatpush1.bf16.msra.mxu0 0
      %1005 = vmatprep.subr.bf16.mxu0 0
      %1006 = vmatpush1.bf16.msra.mxu0 0
      %1007 = vmatprep.subr.bf16.mxu0 0
      %1008 = vmatpush1.bf16.msra.mxu0 0
      %1009 = vmatprep.subr.bf16.mxu0 0
      %1010 = vmatpush1.bf16.msra.mxu0 0
      %1011 = vmatprep.subr.bf16.mxu0 0
      %1012 = vmatpush1.bf16.msra.mxu0 0
      %1013 = vmatprep.subr.bf16.mxu0 0
      %1014 = vmatpush1.bf16.msra.mxu0 0
      %1015 = vmatprep.subr.bf16.mxu0 0
      %1016 = vmatpush1.bf16.msra.mxu0 0
      %1017 = vmatprep.subr.bf16.mxu0 0
      %1018 = vmatpush1.bf16.msra.mxu0 0
      %1019 = vmatprep.subr.bf16.mxu0 0
      %1020 = vmatpush1.bf16.msra.mxu0 0
      %1021 = vmatprep.subr.bf16.mxu0 0
      %1022 = vmatpush1.bf16.msra.mxu0 0
      %1023 = vmatprep.subr.bf16.mxu0 0
      %1024 = vmatpush1.bf16.msra.mxu0 0
      %1025 = vmatprep.subr.bf16.mxu0 0
      %1026 = vmatpush1.bf16.msra.mxu0 0
      %1027 = vmatprep.subr.bf16.mxu0 0
      %1028 = vmatpush1.bf16.msra.mxu0 0
      %1029 = vmatprep.mubr.bf16.mxu0 0
      %1030 = vmatmul.mubr.bf16.gmra.mrb[0].mxu0 %v947
      %v1031 = vpop.f32.mrb[0].mxu0
      %v1032 = vadd.f32 0.0, %v1031
      %v1033 = vpop.f32.mrb[0].mxu0
      %v1034 = vpop.f32.mrb[0].mxu0
      %v1035 = vadd.f32 0.0, %v1034
      %v1036 = vpop.f32.mrb[0].mxu0
      %1037 = vmatprep.mubr.bf16.mxu0 0
      %1038 = vmatmul.mubr.bf16.gmra.mrb[0].mxu0 %v950
      %v1039 = vpop.f32.mrb[0].mxu0
      %v1040 = vadd.f32 0.0, %v1039
      %v1041 = vpop.f32.mrb[0].mxu0
      %v1042 = vpop.f32.mrb[0].mxu0
      %v1043 = vadd.f32 0.0, %v1042
      %v1044 = vpop.f32.mrb[0].mxu0
      %1045 = vmatprep.mubr.bf16.mxu0 0
      %1046 = vmatmul.mubr.bf16.gmra.mrb[0].mxu0 %v953
      %v1047 = vpop.f32.mrb[0].mxu0
      %v1048 = vadd.f32 0.0, %v1047
      %v1049 = vpop.f32.mrb[0].mxu0
      %v1050 = vpop.f32.mrb[0].mxu0
      %v1051 = vadd.f32 0.0, %v1050
      %v1052 = vpop.f32.mrb[0].mxu0
      %1053 = vmatprep.mubr.bf16.mxu0 0
      %1054 = vmatmul.mubr.bf16.gmra.mrb[0].mxu0 %v956
      %v1055 = vpop.f32.mrb[0].mxu0
      %v1056 = vadd.f32 0.0, %v1055
      %v1057 = vpop.f32.mrb[0].mxu0
      %v1058 = vpop.f32.mrb[0].mxu0
      %v1059 = vadd.f32 0.0, %v1058
      %v1060 = vpop.f32.mrb[0].mxu0
      %1061 = vmatprep.mubr.bf16.mxu0 0
      %1062 = vmatmul.mubr.bf16.gmra.mrb[0].mxu0 %v959
      %v1063 = vpop.f32.mrb[0].mxu0
      %v1064 = vadd.f32 0.0, %v1063
      %v1065 = vpop.f32.mrb[0].mxu0
      %v1066 = vpop.f32.mrb[0].mxu0
      %v1067 = vadd.f32 0.0, %v1066
      %v1068 = vpop.f32.mrb[0].mxu0
      %1069 = vmatprep.mubr.bf16.mxu0 0
      %1070 = vmatmul.mubr.bf16.gmra.mrb[0].mxu0 %v962
      %v1071 = vpop.f32.mrb[0].mxu0
      %v1072 = vadd.f32 0.0, %v1071
      %v1073 = vpop.f32.mrb[0].mxu0
      %v1074 = vpop.f32.mrb[0].mxu0
      %v1075 = vadd.f32 0.0, %v1074
      %v1076 = vpop.f32.mrb[0].mxu0
      %1077 = vmatprep.mubr.bf16.mxu0 0
      %1078 = vmatmul.mubr.bf16.gmra.mrb[0].mxu0 %v965
      %v1079 = vpop.f32.mrb[0].mxu0
      %v1080 = vadd.f32 0.0, %v1079
      %v1081 = vpop.f32.mrb[0].mxu0
      %v1082 = vpop.f32.mrb[0].mxu0
      %v1083 = vadd.f32 0.0, %v1082
      %v1084 = vpop.f32.mrb[0].mxu0
      %1085 = vmatprep.mubr.bf16.mxu0 0
      %1086 = vmatmul.mubr.bf16.gmra.mrb[0].mxu0 %v968
      %v1087 = vpop.f32.mrb[0].mxu0
      %v1088 = vadd.f32 0.0, %v1087
      %v1089 = vpop.f32.mrb[0].mxu0
      %v1090 = vpop.f32.mrb[0].mxu0
      %v1091 = vadd.f32 0.0, %v1090
      %v1092 = vpop.f32.mrb[0].mxu0
      %1093 = vmatprep.mubr.bf16.mxu0 0
      %1094 = vmatmul.mubr.bf16.gmra.mrb[0].mxu0 %v971
      %v1095 = vpop.f32.mrb[0].mxu0
      %v1096 = vadd.f32 0.0, %v1095
      %v1097 = vpop.f32.mrb[0].mxu0
      %v1098 = vpop.f32.mrb[0].mxu0
      %v1099 = vadd.f32 0.0, %v1098
      %v1100 = vpop.f32.mrb[0].mxu0
      %1101 = vmatprep.mubr.bf16.mxu0 0
      %1102 = vmatmul.mubr.bf16.gmra.mrb[0].mxu0 %v974
      %v1103 = vpop.f32.mrb[0].mxu0
      %v1104 = vadd.f32 0.0, %v1103
      %v1105 = vpop.f32.mrb[0].mxu0
      %v1106 = vpop.f32.mrb[0].mxu0
      %v1107 = vadd.f32 0.0, %v1106
      %v1108 = vpop.f32.mrb[0].mxu0
      %1109 = vmatprep.mubr.bf16.mxu0 0
      %1110 = vmatmul.mubr.bf16.gmra.mrb[0].mxu0 %v977
      %v1111 = vpop.f32.mrb[0].mxu0
      %v1112 = vadd.f32 0.0, %v1111
      %v1113 = vpop.f32.mrb[0].mxu0
      %v1114 = vpop.f32.mrb[0].mxu0
      %v1115 = vadd.f32 0.0, %v1114
      %v1116 = vpop.f32.mrb[0].mxu0
      %1117 = vmatprep.mubr.bf16.mxu0 0
      %1118 = vmatmul.mubr.bf16.gmra.mrb[0].mxu0 %v980
      %v1119 = vpop.f32.mrb[0].mxu0
      %v1120 = vadd.f32 0.0, %v1119
      %v1121 = vpop.f32.mrb[0].mxu0
      %v1122 = vpop.f32.mrb[0].mxu0
      %v1123 = vadd.f32 0.0, %v1122
      %v1124 = vpop.f32.mrb[0].mxu0
      %1125 = vmatprep.mubr.bf16.mxu0 0
      %1126 = vmatmul.mubr.bf16.gmra.mrb[0].mxu0 %v983
      %v1127 = vpop.f32.mrb[0].mxu0
      %v1128 = vadd.f32 0.0, %v1127
      %v1129 = vpop.f32.mrb[0].mxu0
      %v1130 = vpop.f32.mrb[0].mxu0
      %v1131 = vadd.f32 0.0, %v1130
      %v1132 = vpop.f32.mrb[0].mxu0
      %1133 = vmatprep.mubr.bf16.mxu0 0
      %1134 = vmatmul.mubr.bf16.gmra.mrb[0].mxu0 %v986
      %v1135 = vpop.f32.mrb[0].mxu0
      %v1136 = vadd.f32 0.0, %v1135
      %v1137 = vpop.f32.mrb[0].mxu0
      %v1138 = vpop.f32.mrb[0].mxu0
      %v1139 = vadd.f32 0.0, %v1138
      %v1140 = vpop.f32.mrb[0].mxu0
      %1141 = vmatprep.mubr.bf16.mxu0 0
      %1142 = vmatmul.mubr.bf16.gmra.mrb[0].mxu0 %v989
      %v1143 = vpop.f32.mrb[0].mxu0
      %v1144 = vadd.f32 0.0, %v1143
      %v1145 = vpop.f32.mrb[0].mxu0
      %v1146 = vpop.f32.mrb[0].mxu0
      %v1147 = vadd.f32 0.0, %v1146
      %v1148 = vpop.f32.mrb[0].mxu0
      %1149 = vmatprep.mubr.bf16.mxu0 0
      %1150 = vmatmul.mubr.bf16.gmra.mrb[0].mxu0 %v992
      %v1151 = vpop.f32.mrb[0].mxu0
      %v1152 = vadd.f32 0.0, %v1151
      %v1153 = vpop.f32.mrb[0].mxu0
      %v1154 = vpop.f32.mrb[0].mxu0
      %v1155 = vadd.f32 0.0, %v1154
      %v1156 = vpop.f32.mrb[0].mxu0
      %1157 = vdwg.mxu0
      %v1158 = vadd.f32 %v653, %v1032
      %v1159 = vadd.f32 %v654, %v1035
      %v1160 = vadd.f32 %v655, %v1040
      %v1161 = vadd.f32 %v656, %v1043
      %v1162 = vadd.f32 %v657, %v1048
      %v1163 = vadd.f32 %v658, %v1051
      %v1164 = vadd.f32 %v659, %v1056
      %v1165 = vadd.f32 %v660, %v1059
      %v1166 = vadd.f32 %v661, %v1064
      %v1167 = vadd.f32 %v662, %v1067
      %v1168 = vadd.f32 %v663, %v1072
      %v1169 = vadd.f32 %v664, %v1075
      %v1170 = vadd.f32 %v665, %v1080
      %v1171 = vadd.f32 %v666, %v1083
      %v1172 = vadd.f32 %v667, %v1088
      %v1173 = vadd.f32 %v668, %v1091
      %v1174 = vadd.f32 %v669, %v1096
      %v1175 = vadd.f32 %v670, %v1099
      %v1176 = vadd.f32 %v671, %v1104
      %v1177 = vadd.f32 %v672, %v1107
      %v1178 = vadd.f32 %v673, %v1112
      %v1179 = vadd.f32 %v674, %v1115
      %v1180 = vadd.f32 %v675, %v1120
      %v1181 = vadd.f32 %v676, %v1123
      %v1182 = vadd.f32 %v677, %v1128
      %v1183 = vadd.f32 %v678, %v1131
      %v1184 = vadd.f32 %v679, %v1136
      %v1185 = vadd.f32 %v680, %v1139
      %v1186 = vadd.f32 %v681, %v1144
      %v1187 = vadd.f32 %v682, %v1147
      %v1188 = vadd.f32 %v683, %v1152
      %v1189 = vadd.f32 %v684, %v1155
      %v1190 = vld [vmem:[%s238] sm:$0xc]
      %v1191 = vld [vmem:[%s238 + $0x8] sm:$0x3]
      %v1192 = vld [vmem:[%s238 + $0xc] sm:$0xc]
      %v1193 = vld [vmem:[%s238 + $0x14] sm:$0x3]
      %v1194 = vld [vmem:[%s238 + $0x18] sm:$0xc]
      %v1195 = vld [vmem:[%s238 + $0x20] sm:$0x3]
      %v1196 = vld [vmem:[%s238 + $0x24] sm:$0xc]
      %v1197 = vld [vmem:[%s238 + $0x2c] sm:$0x3]
      %v1198 = vld [vmem:[%s238 + $0x30] sm:$0xc]
      %v1199 = vld [vmem:[%s238 + $0x38] sm:$0x3]
      %v1200 = vld [vmem:[%s238 + $0x3c] sm:$0xc]
      %v1201 = vld [vmem:[%s238 + $0x44] sm:$0x3]
      %v1202 = vld [vmem:[%s238 + $0x48] sm:$0xc]
      %v1203 = vld [vmem:[%s238 + $0x50] sm:$0x3]
      %v1204 = vld [vmem:[%s238 + $0x54] sm:$0xc]
      %v1205 = vld [vmem:[%s238 + $0x5c] sm:$0x3]
      %v1206 = vld [vmem:[%s238 + $0x60] sm:$0xc]
      %v1207 = vld [vmem:[%s238 + $0x68] sm:$0x3]
      %v1208 = vld [vmem:[%s238 + $0x6c] sm:$0xc]
      %v1209 = vld [vmem:[%s238 + $0x74] sm:$0x3]
      %v1210 = vld [vmem:[%s238 + $0x78] sm:$0xc]
      %v1211 = vld [vmem:[%s238 + $0x80] sm:$0x3]
      %v1212 = vld [vmem:[%s238 + $0x84] sm:$0xc]
      %v1213 = vld [vmem:[%s238 + $0x8c] sm:$0x3]
      %v1214 = vld [vmem:[%s238 + $0x90] sm:$0xc]
      %v1215 = vld [vmem:[%s238 + $0x98] sm:$0x3]
      %v1216 = vld [vmem:[%s238 + $0x9c] sm:$0xc]
      %v1217 = vld [vmem:[%s238 + $0xa4] sm:$0x3]
      %v1218 = vld [vmem:[%s238 + $0xa8] sm:$0xc]
      %v1219 = vld [vmem:[%s238 + $0xb0] sm:$0x3]
      %v1220 = vld [vmem:[%s238 + $0xb4] sm:$0xc]
      %v1221 = vld [vmem:[%s238 + $0xbc] sm:$0x3]
      %vm1254 = vcmask 1041408
      %vm1255 = vcmask 1045508
      %vm1256 = vmor %vm1254, %vm1255
      %v1257 = vrot.slane %v1190, 6
      %v1258 = vrot.slane %v1257, 4
      %v1259 = vrot.slane %v686, 6
      %v1260 = vsel %vm1256, %v1258, %v1259
      %v1261 = vrot.slane %v1259, 4
      %v1262 = vrot.slane %v1191, 6
      %v1263 = vsel %vm1256, %v1261, %v1262
      %v1264 = vrot.slane %v1192, 6
      %v1265 = vrot.slane %v1264, 4
      %v1266 = vrot.slane %v689, 6
      %v1267 = vsel %vm1256, %v1265, %v1266
      %v1268 = vrot.slane %v1266, 4
      %v1269 = vrot.slane %v1193, 6
      %v1270 = vsel %vm1256, %v1268, %v1269
      %v1271 = vrot.slane %v1194, 6
      %v1272 = vrot.slane %v1271, 4
      %v1273 = vrot.slane %v692, 6
      %v1274 = vsel %vm1256, %v1272, %v1273
      %v1275 = vrot.slane %v1273, 4
      %v1276 = vrot.slane %v1195, 6
      %v1277 = vsel %vm1256, %v1275, %v1276
      %v1278 = vrot.slane %v1196, 6
      %v1279 = vrot.slane %v1278, 4
      %v1280 = vrot.slane %v695, 6
      %v1281 = vsel %vm1256, %v1279, %v1280
      %v1282 = vrot.slane %v1280, 4
      %v1283 = vrot.slane %v1197, 6
      %v1284 = vsel %vm1256, %v1282, %v1283
      %v1285 = vrot.slane %v1198, 6
      %v1286 = vrot.slane %v1285, 4
      %v1287 = vrot.slane %v698, 6
      %v1288 = vsel %vm1256, %v1286, %v1287
      %v1289 = vrot.slane %v1287, 4
      %v1290 = vrot.slane %v1199, 6
      %v1291 = vsel %vm1256, %v1289, %v1290
      %v1292 = vrot.slane %v1200, 6
      %v1293 = vrot.slane %v1292, 4
      %v1294 = vrot.slane %v701, 6
      %v1295 = vsel %vm1256, %v1293, %v1294
      %v1296 = vrot.slane %v1294, 4
      %v1297 = vrot.slane %v1201, 6
      %v1298 = vsel %vm1256, %v1296, %v1297
      %v1299 = vrot.slane %v1202, 6
      %v1300 = vrot.slane %v1299, 4
      %v1301 = vrot.slane %v704, 6
      %v1302 = vsel %vm1256, %v1300, %v1301
      %v1303 = vrot.slane %v1301, 4
      %v1304 = vrot.slane %v1203, 6
      %v1305 = vsel %vm1256, %v1303, %v1304
      %v1306 = vrot.slane %v1204, 6
      %v1307 = vrot.slane %v1306, 4
      %v1308 = vrot.slane %v707, 6
      %v1309 = vsel %vm1256, %v1307, %v1308
      %v1310 = vrot.slane %v1308, 4
      %v1311 = vrot.slane %v1205, 6
      %v1312 = vsel %vm1256, %v1310, %v1311
      %v1313 = vrot.slane %v1206, 6
      %v1314 = vrot.slane %v1313, 4
      %v1315 = vrot.slane %v710, 6
      %v1316 = vsel %vm1256, %v1314, %v1315
      %v1317 = vrot.slane %v1315, 4
      %v1318 = vrot.slane %v1207, 6
      %v1319 = vsel %vm1256, %v1317, %v1318
      %v1320 = vrot.slane %v1208, 6
      %v1321 = vrot.slane %v1320, 4
      %v1322 = vrot.slane %v713, 6
      %v1323 = vsel %vm1256, %v1321, %v1322
      %v1324 = vrot.slane %v1322, 4
      %v1325 = vrot.slane %v1209, 6
      %v1326 = vsel %vm1256, %v1324, %v1325
      %v1327 = vrot.slane %v1210, 6
      %v1328 = vrot.slane %v1327, 4
      %v1329 = vrot.slane %v716, 6
      %v1330 = vsel %vm1256, %v1328, %v1329
      %v1331 = vrot.slane %v1329, 4
      %v1332 = vrot.slane %v1211, 6
      %v1333 = vsel %vm1256, %v1331, %v1332
      %v1334 = vrot.slane %v1212, 6
      %v1335 = vrot.slane %v1334, 4
      %v1336 = vrot.slane %v719, 6
      %v1337 = vsel %vm1256, %v1335, %v1336
      %v1338 = vrot.slane %v1336, 4
      %v1339 = vrot.slane %v1213, 6
      %v1340 = vsel %vm1256, %v1338, %v1339
      %v1341 = vrot.slane %v1214, 6
      %v1342 = vrot.slane %v1341, 4
      %v1343 = vrot.slane %v722, 6
      %v1344 = vsel %vm1256, %v1342, %v1343
      %v1345 = vrot.slane %v1343, 4
      %v1346 = vrot.slane %v1215, 6
      %v1347 = vsel %vm1256, %v1345, %v1346
      %v1348 = vrot.slane %v1216, 6
      %v1349 = vrot.slane %v1348, 4
      %v1350 = vrot.slane %v725, 6
      %v1351 = vsel %vm1256, %v1349, %v1350
      %v1352 = vrot.slane %v1350, 4
      %v1353 = vrot.slane %v1217, 6
      %v1354 = vsel %vm1256, %v1352, %v1353
      %v1355 = vrot.slane %v1218, 6
      %v1356 = vrot.slane %v1355, 4
      %v1357 = vrot.slane %v728, 6
      %v1358 = vsel %vm1256, %v1356, %v1357
      %v1359 = vrot.slane %v1357, 4
      %v1360 = vrot.slane %v1219, 6
      %v1361 = vsel %vm1256, %v1359, %v1360
      %v1362 = vrot.slane %v1220, 6
      %v1363 = vrot.slane %v1362, 4
      %v1364 = vrot.slane %v731, 6
      %v1365 = vsel %vm1256, %v1363, %v1364
      %v1366 = vrot.slane %v1364, 4
      %v1367 = vrot.slane %v1221, 6
      %v1368 = vsel %vm1256, %v1366, %v1367
      %s1369 = scalar_lea.vmem %s245, 4
      %v1370 = vld [vmem:[%s1369] sm:$0x3]
      %v1371 = vunpack.c.l.b16 %v1260
      %v1372 = vunpack.c.l.b16 %v1263
      %v1373 = vunpack.c.l.b16 %v1267
      %v1374 = vunpack.c.l.b16 %v1270
      %v1375 = vunpack.c.l.b16 %v1274
      %v1376 = vunpack.c.l.b16 %v1277
      %v1377 = vunpack.c.l.b16 %v1281
      %v1378 = vunpack.c.l.b16 %v1284
      %v1379 = vunpack.c.l.b16 %v1288
      %v1380 = vunpack.c.l.b16 %v1291
      %v1381 = vunpack.c.l.b16 %v1295
      %v1382 = vunpack.c.l.b16 %v1298
      %v1383 = vunpack.c.l.b16 %v1302
      %v1384 = vunpack.c.l.b16 %v1305
      %v1385 = vunpack.c.l.b16 %v1309
      %v1386 = vunpack.c.l.b16 %v1312
      %v1387 = vunpack.c.l.b16 %v1316
      %v1388 = vunpack.c.l.b16 %v1319
      %v1389 = vunpack.c.l.b16 %v1323
      %v1390 = vunpack.c.l.b16 %v1326
      %v1391 = vunpack.c.l.b16 %v1330
      %v1392 = vunpack.c.l.b16 %v1333
      %v1393 = vunpack.c.l.b16 %v1337
      %v1394 = vunpack.c.l.b16 %v1340
      %v1395 = vunpack.c.l.b16 %v1344
      %v1396 = vunpack.c.l.b16 %v1347
      %v1397 = vunpack.c.l.b16 %v1351
      %v1398 = vunpack.c.l.b16 %v1354
      %v1399 = vunpack.c.l.b16 %v1358
      %v1400 = vunpack.c.l.b16 %v1361
      %v1401 = vunpack.c.l.b16 %v1365
      %v1402 = vunpack.c.l.b16 %v1368
      %v1403 = vpack.c.b16 %v1372, %v1371
      %v1404 = vpack.c.b16 %v1374, %v1373
      %v1405 = vpack.c.b16 %v1376, %v1375
      %v1406 = vpack.c.b16 %v1378, %v1377
      %v1407 = vpack.c.b16 %v1380, %v1379
      %v1408 = vpack.c.b16 %v1382, %v1381
      %v1409 = vpack.c.b16 %v1384, %v1383
      %v1410 = vpack.c.b16 %v1386, %v1385
      %v1411 = vpack.c.b16 %v1388, %v1387
      %v1412 = vpack.c.b16 %v1390, %v1389
      %v1413 = vpack.c.b16 %v1392, %v1391
      %v1414 = vpack.c.b16 %v1394, %v1393
      %v1415 = vpack.c.b16 %v1396, %v1395
      %v1416 = vpack.c.b16 %v1398, %v1397
      %v1417 = vpack.c.b16 %v1400, %v1399
      %v1418 = vpack.c.b16 %v1402, %v1401
      %v1420 = vsel %vm439, %v1403, 0
      %v1423 = vsel %vm439, %v1404, 0
      %v1426 = vsel %vm439, %v1405, 0
      %v1429 = vsel %vm439, %v1406, 0
      %v1432 = vsel %vm439, %v1407, 0
      %v1435 = vsel %vm439, %v1408, 0
      %v1438 = vsel %vm439, %v1409, 0
      %v1441 = vsel %vm439, %v1410, 0
      %v1444 = vsel %vm439, %v1411, 0
      %v1447 = vsel %vm439, %v1412, 0
      %v1450 = vsel %vm439, %v1413, 0
      %v1453 = vsel %vm439, %v1414, 0
      %v1456 = vsel %vm439, %v1415, 0
      %v1459 = vsel %vm439, %v1416, 0
      %v1462 = vsel %vm439, %v1417, 0
      %v1465 = vsel %vm439, %v1418, 0
      %v1468 = vsel %vm488, %v1370, 0
      %1470 = vmatprep.subr.bf16.mxu0 0
      %1471 = vmatpush1.bf16.msra.mxu0 %v1468
      %1472 = vmatprep.subr.bf16.mxu0 0
      %1473 = vmatpush1.bf16.msra.mxu0 0
      %1474 = vmatprep.subr.bf16.mxu0 0
      %1475 = vmatpush1.bf16.msra.mxu0 0
      %1476 = vmatprep.subr.bf16.mxu0 0
      %1477 = vmatpush1.bf16.msra.mxu0 0
      %1478 = vmatprep.subr.bf16.mxu0 0
      %1479 = vmatpush1.bf16.msra.mxu0 0
      %1480 = vmatprep.subr.bf16.mxu0 0
      %1481 = vmatpush1.bf16.msra.mxu0 0
      %1482 = vmatprep.subr.bf16.mxu0 0
      %1483 = vmatpush1.bf16.msra.mxu0 0
      %1484 = vmatprep.subr.bf16.mxu0 0
      %1485 = vmatpush1.bf16.msra.mxu0 0
      %1486 = vmatprep.subr.bf16.mxu0 0
      %1487 = vmatpush1.bf16.msra.mxu0 0
      %1488 = vmatprep.subr.bf16.mxu0 0
      %1489 = vmatpush1.bf16.msra.mxu0 0
      %1490 = vmatprep.subr.bf16.mxu0 0
      %1491 = vmatpush1.bf16.msra.mxu0 0
      %1492 = vmatprep.subr.bf16.mxu0 0
      %1493 = vmatpush1.bf16.msra.mxu0 0
      %1494 = vmatprep.subr.bf16.mxu0 0
      %1495 = vmatpush1.bf16.msra.mxu0 0
      %1496 = vmatprep.subr.bf16.mxu0 0
      %1497 = vmatpush1.bf16.msra.mxu0 0
      %1498 = vmatprep.subr.bf16.mxu0 0
      %1499 = vmatpush1.bf16.msra.mxu0 0
      %1500 = vmatprep.subr.bf16.mxu0 0
      %1501 = vmatpush1.bf16.msra.mxu0 0
      %1502 = vmatprep.mubr.bf16.mxu0 0
      %1503 = vmatmul.mubr.bf16.gmra.mrb[0].mxu0 %v1420
      %v1504 = vpop.f32.mrb[0].mxu0
      %v1505 = vadd.f32 0.0, %v1504
      %v1506 = vpop.f32.mrb[0].mxu0
      %v1507 = vpop.f32.mrb[0].mxu0
      %v1508 = vadd.f32 0.0, %v1507
      %v1509 = vpop.f32.mrb[0].mxu0
      %1510 = vmatprep.mubr.bf16.mxu0 0
      %1511 = vmatmul.mubr.bf16.gmra.mrb[0].mxu0 %v1423
      %v1512 = vpop.f32.mrb[0].mxu0
      %v1513 = vadd.f32 0.0, %v1512
      %v1514 = vpop.f32.mrb[0].mxu0
      %v1515 = vpop.f32.mrb[0].mxu0
      %v1516 = vadd.f32 0.0, %v1515
      %v1517 = vpop.f32.mrb[0].mxu0
      %1518 = vmatprep.mubr.bf16.mxu0 0
      %1519 = vmatmul.mubr.bf16.gmra.mrb[0].mxu0 %v1426
      %v1520 = vpop.f32.mrb[0].mxu0
      %v1521 = vadd.f32 0.0, %v1520
      %v1522 = vpop.f32.mrb[0].mxu0
      %v1523 = vpop.f32.mrb[0].mxu0
      %v1524 = vadd.f32 0.0, %v1523
      %v1525 = vpop.f32.mrb[0].mxu0
      %1526 = vmatprep.mubr.bf16.mxu0 0
      %1527 = vmatmul.mubr.bf16.gmra.mrb[0].mxu0 %v1429
      %v1528 = vpop.f32.mrb[0].mxu0
      %v1529 = vadd.f32 0.0, %v1528
      %v1530 = vpop.f32.mrb[0].mxu0
      %v1531 = vpop.f32.mrb[0].mxu0
      %v1532 = vadd.f32 0.0, %v1531
      %v1533 = vpop.f32.mrb[0].mxu0
      %1534 = vmatprep.mubr.bf16.mxu0 0
      %1535 = vmatmul.mubr.bf16.gmra.mrb[0].mxu0 %v1432
      %v1536 = vpop.f32.mrb[0].mxu0
      %v1537 = vadd.f32 0.0, %v1536
      %v1538 = vpop.f32.mrb[0].mxu0
      %v1539 = vpop.f32.mrb[0].mxu0
      %v1540 = vadd.f32 0.0, %v1539
      %v1541 = vpop.f32.mrb[0].mxu0
      %1542 = vmatprep.mubr.bf16.mxu0 0
      %1543 = vmatmul.mubr.bf16.gmra.mrb[0].mxu0 %v1435
      %v1544 = vpop.f32.mrb[0].mxu0
      %v1545 = vadd.f32 0.0, %v1544
      %v1546 = vpop.f32.mrb[0].mxu0
      %v1547 = vpop.f32.mrb[0].mxu0
      %v1548 = vadd.f32 0.0, %v1547
      %v1549 = vpop.f32.mrb[0].mxu0
      %1550 = vmatprep.mubr.bf16.mxu0 0
      %1551 = vmatmul.mubr.bf16.gmra.mrb[0].mxu0 %v1438
      %v1552 = vpop.f32.mrb[0].mxu0
      %v1553 = vadd.f32 0.0, %v1552
      %v1554 = vpop.f32.mrb[0].mxu0
      %v1555 = vpop.f32.mrb[0].mxu0
      %v1556 = vadd.f32 0.0, %v1555
      %v1557 = vpop.f32.mrb[0].mxu0
      %1558 = vmatprep.mubr.bf16.mxu0 0
      %1559 = vmatmul.mubr.bf16.gmra.mrb[0].mxu0 %v1441
      %v1560 = vpop.f32.mrb[0].mxu0
      %v1561 = vadd.f32 0.0, %v1560
      %v1562 = vpop.f32.mrb[0].mxu0
      %v1563 = vpop.f32.mrb[0].mxu0
      %v1564 = vadd.f32 0.0, %v1563
      %v1565 = vpop.f32.mrb[0].mxu0
      %1566 = vmatprep.mubr.bf16.mxu0 0
      %1567 = vmatmul.mubr.bf16.gmra.mrb[0].mxu0 %v1444
      %v1568 = vpop.f32.mrb[0].mxu0
      %v1569 = vadd.f32 0.0, %v1568
      %v1570 = vpop.f32.mrb[0].mxu0
      %v1571 = vpop.f32.mrb[0].mxu0
      %v1572 = vadd.f32 0.0, %v1571
      %v1573 = vpop.f32.mrb[0].mxu0
      %1574 = vmatprep.mubr.bf16.mxu0 0
      %1575 = vmatmul.mubr.bf16.gmra.mrb[0].mxu0 %v1447
      %v1576 = vpop.f32.mrb[0].mxu0
      %v1577 = vadd.f32 0.0, %v1576
      %v1578 = vpop.f32.mrb[0].mxu0
      %v1579 = vpop.f32.mrb[0].mxu0
      %v1580 = vadd.f32 0.0, %v1579
      %v1581 = vpop.f32.mrb[0].mxu0
      %1582 = vmatprep.mubr.bf16.mxu0 0
      %1583 = vmatmul.mubr.bf16.gmra.mrb[0].mxu0 %v1450
      %v1584 = vpop.f32.mrb[0].mxu0
      %v1585 = vadd.f32 0.0, %v1584
      %v1586 = vpop.f32.mrb[0].mxu0
      %v1587 = vpop.f32.mrb[0].mxu0
      %v1588 = vadd.f32 0.0, %v1587
      %v1589 = vpop.f32.mrb[0].mxu0
      %1590 = vmatprep.mubr.bf16.mxu0 0
      %1591 = vmatmul.mubr.bf16.gmra.mrb[0].mxu0 %v1453
      %v1592 = vpop.f32.mrb[0].mxu0
      %v1593 = vadd.f32 0.0, %v1592
      %v1594 = vpop.f32.mrb[0].mxu0
      %v1595 = vpop.f32.mrb[0].mxu0
      %v1596 = vadd.f32 0.0, %v1595
      %v1597 = vpop.f32.mrb[0].mxu0
      %1598 = vmatprep.mubr.bf16.mxu0 0
      %1599 = vmatmul.mubr.bf16.gmra.mrb[0].mxu0 %v1456
      %v1600 = vpop.f32.mrb[0].mxu0
      %v1601 = vadd.f32 0.0, %v1600
      %v1602 = vpop.f32.mrb[0].mxu0
      %v1603 = vpop.f32.mrb[0].mxu0
      %v1604 = vadd.f32 0.0, %v1603
      %v1605 = vpop.f32.mrb[0].mxu0
      %1606 = vmatprep.mubr.bf16.mxu0 0
      %1607 = vmatmul.mubr.bf16.gmra.mrb[0].mxu0 %v1459
      %v1608 = vpop.f32.mrb[0].mxu0
      %v1609 = vadd.f32 0.0, %v1608
      %v1610 = vpop.f32.mrb[0].mxu0
      %v1611 = vpop.f32.mrb[0].mxu0
      %v1612 = vadd.f32 0.0, %v1611
      %v1613 = vpop.f32.mrb[0].mxu0
      %1614 = vmatprep.mubr.bf16.mxu0 0
      %1615 = vmatmul.mubr.bf16.gmra.mrb[0].mxu0 %v1462
      %v1616 = vpop.f32.mrb[0].mxu0
      %v1617 = vadd.f32 0.0, %v1616
      %v1618 = vpop.f32.mrb[0].mxu0
      %v1619 = vpop.f32.mrb[0].mxu0
      %v1620 = vadd.f32 0.0, %v1619
      %v1621 = vpop.f32.mrb[0].mxu0
      %1622 = vmatprep.mubr.bf16.mxu0 0
      %1623 = vmatmul.mubr.bf16.gmra.mrb[0].mxu0 %v1465
      %v1624 = vpop.f32.mrb[0].mxu0
      %v1625 = vadd.f32 0.0, %v1624
      %v1626 = vpop.f32.mrb[0].mxu0
      %v1627 = vpop.f32.mrb[0].mxu0
      %v1628 = vadd.f32 0.0, %v1627
      %v1629 = vpop.f32.mrb[0].mxu0
      %1630 = vdwg.mxu0
      %v1631 = vadd.f32 %v1158, %v1505
      %v1632 = vadd.f32 %v1159, %v1508
      %v1633 = vadd.f32 %v1160, %v1513
      %v1634 = vadd.f32 %v1161, %v1516
      %v1635 = vadd.f32 %v1162, %v1521
      %v1636 = vadd.f32 %v1163, %v1524
      %v1637 = vadd.f32 %v1164, %v1529
      %v1638 = vadd.f32 %v1165, %v1532
      %v1639 = vadd.f32 %v1166, %v1537
      %v1640 = vadd.f32 %v1167, %v1540
      %v1641 = vadd.f32 %v1168, %v1545
      %v1642 = vadd.f32 %v1169, %v1548
      %v1643 = vadd.f32 %v1170, %v1553
      %v1644 = vadd.f32 %v1171, %v1556
      %v1645 = vadd.f32 %v1172, %v1561
      %v1646 = vadd.f32 %v1173, %v1564
      %v1647 = vadd.f32 %v1174, %v1569
      %v1648 = vadd.f32 %v1175, %v1572
      %v1649 = vadd.f32 %v1176, %v1577
      %v1650 = vadd.f32 %v1177, %v1580
      %v1651 = vadd.f32 %v1178, %v1585
      %v1652 = vadd.f32 %v1179, %v1588
      %v1653 = vadd.f32 %v1180, %v1593
      %v1654 = vadd.f32 %v1181, %v1596
      %v1655 = vadd.f32 %v1182, %v1601
      %v1656 = vadd.f32 %v1183, %v1604
      %v1657 = vadd.f32 %v1184, %v1609
      %v1658 = vadd.f32 %v1185, %v1612
      %v1659 = vadd.f32 %v1186, %v1617
      %v1660 = vadd.f32 %v1187, %v1620
      %v1661 = vadd.f32 %v1188, %v1625
      %v1662 = vadd.f32 %v1189, %v1628
      %vm1663 = vcmask 64512
      %1664 = vst.msk [vmem:[#allocation2] sm:$0xff] %vm1663, %v1631
      %1665 = vst.msk [vmem:[#allocation2 + $0x8] sm:$0xff] %vm1663, %v1632
      %1666 = vst.msk [vmem:[#allocation2 + $0x10] sm:$0xff] %vm1663, %v1633
      %1667 = vst.msk [vmem:[#allocation2 + $0x18] sm:$0xff] %vm1663, %v1634
      %1668 = vst.msk [vmem:[#allocation2 + $0x20] sm:$0xff] %vm1663, %v1635
      %1669 = vst.msk [vmem:[#allocation2 + $0x28] sm:$0xff] %vm1663, %v1636
      %1670 = vst.msk [vmem:[#allocation2 + $0x30] sm:$0xff] %vm1663, %v1637
      %1671 = vst.msk [vmem:[#allocation2 + $0x38] sm:$0xff] %vm1663, %v1638
      %1672 = vst.msk [vmem:[#allocation2 + $0x40] sm:$0xff] %vm1663, %v1639
      %1673 = vst.msk [vmem:[#allocation2 + $0x48] sm:$0xff] %vm1663, %v1640
      %1674 = vst.msk [vmem:[#allocation2 + $0x50] sm:$0xff] %vm1663, %v1641
      %1675 = vst.msk [vmem:[#allocation2 + $0x58] sm:$0xff] %vm1663, %v1642
      %1676 = vst.msk [vmem:[#allocation2 + $0x60] sm:$0xff] %vm1663, %v1643
      %1677 = vst.msk [vmem:[#allocation2 + $0x68] sm:$0xff] %vm1663, %v1644
      %1678 = vst.msk [vmem:[#allocation2 + $0x70] sm:$0xff] %vm1663, %v1645
      %1679 = vst.msk [vmem:[#allocation2 + $0x78] sm:$0xff] %vm1663, %v1646
      %1680 = vst.msk [vmem:[#allocation2 + $0x80] sm:$0xff] %vm1663, %v1647
      %1681 = vst.msk [vmem:[#allocation2 + $0x88] sm:$0xff] %vm1663, %v1648
      %1682 = vst.msk [vmem:[#allocation2 + $0x90] sm:$0xff] %vm1663, %v1649
      %1683 = vst.msk [vmem:[#allocation2 + $0x98] sm:$0xff] %vm1663, %v1650
      %1684 = vst.msk [vmem:[#allocation2 + $0xa0] sm:$0xff] %vm1663, %v1651
      %1685 = vst.msk [vmem:[#allocation2 + $0xa8] sm:$0xff] %vm1663, %v1652
      %1686 = vst.msk [vmem:[#allocation2 + $0xb0] sm:$0xff] %vm1663, %v1653
      %1687 = vst.msk [vmem:[#allocation2 + $0xb8] sm:$0xff] %vm1663, %v1654
      %1688 = vst.msk [vmem:[#allocation2 + $0xc0] sm:$0xff] %vm1663, %v1655
      %1689 = vst.msk [vmem:[#allocation2 + $0xc8] sm:$0xff] %vm1663, %v1656
      %1690 = vst.msk [vmem:[#allocation2 + $0xd0] sm:$0xff] %vm1663, %v1657
      %1691 = vst.msk [vmem:[#allocation2 + $0xd8] sm:$0xff] %vm1663, %v1658
      %1692 = vst.msk [vmem:[#allocation2 + $0xe0] sm:$0xff] %vm1663, %v1659
      %1693 = vst.msk [vmem:[#allocation2 + $0xe8] sm:$0xff] %vm1663, %v1660
      %1694 = vst.msk [vmem:[#allocation2 + $0xf0] sm:$0xff] %vm1663, %v1661
      %1695 = vst.msk [vmem:[#allocation2 + $0xf8] sm:$0xff] %vm1663, %v1662
      %p1696 = scmp.eq.s32.totalorder %s21, 2
      // Predicated region
      $region37: #{aspp_forward.2} parent=31 // pred_check
        %p1697 = pneg %p1696
      $region38: #{aspp_forward.2} parent=31 // pred_check_branch
        %1699 = sbr.rel (%p1697) target = $region40
      $region39: #{aspp_forward.2} parent=31 // pred_region
        %v1700 = vld [vmem:[%s2] sm:$0x1]
        %v1702 = vlaneseq
        %v1703 = vshrl.u32 %v1702, 7
        %v1704 = vsub.s32 0, %v1703
        %v1705 = vrot.slane %v1700, %v1704
        %v1707 = vadd.f32 %v1631, %v1705
        %v1708 = vadd.f32 %v1632, %v1705
        %v1709 = vadd.f32 %v1633, %v1705
        %v1710 = vadd.f32 %v1634, %v1705
        %v1711 = vadd.f32 %v1635, %v1705
        %v1712 = vadd.f32 %v1636, %v1705
        %v1713 = vadd.f32 %v1637, %v1705
        %v1714 = vadd.f32 %v1638, %v1705
        %v1715 = vadd.f32 %v1639, %v1705
        %v1716 = vadd.f32 %v1640, %v1705
        %v1717 = vadd.f32 %v1641, %v1705
        %v1718 = vadd.f32 %v1642, %v1705
        %v1719 = vadd.f32 %v1643, %v1705
        %v1720 = vadd.f32 %v1644, %v1705
        %v1721 = vadd.f32 %v1645, %v1705
        %v1722 = vadd.f32 %v1646, %v1705
        %v1723 = vadd.f32 %v1647, %v1705
        %v1724 = vadd.f32 %v1648, %v1705
        %v1725 = vadd.f32 %v1649, %v1705
        %v1726 = vadd.f32 %v1650, %v1705
        %v1727 = vadd.f32 %v1651, %v1705
        %v1728 = vadd.f32 %v1652, %v1705
        %v1729 = vadd.f32 %v1653, %v1705
        %v1730 = vadd.f32 %v1654, %v1705
        %v1731 = vadd.f32 %v1655, %v1705
        %v1732 = vadd.f32 %v1656, %v1705
        %v1733 = vadd.f32 %v1657, %v1705
        %v1734 = vadd.f32 %v1658, %v1705
        %v1735 = vadd.f32 %v1659, %v1705
        %v1736 = vadd.f32 %v1660, %v1705
        %v1737 = vadd.f32 %v1661, %v1705
        %v1738 = vadd.f32 %v1662, %v1705
        %v1739 = vpack.c.bf16 %v1708, %v1707
        %v1740 = vpack.c.bf16 %v1710, %v1709
        %v1741 = vpack.c.bf16 %v1712, %v1711
        %v1742 = vpack.c.bf16 %v1714, %v1713
        %v1743 = vpack.c.bf16 %v1716, %v1715
        %v1744 = vpack.c.bf16 %v1718, %v1717
        %v1745 = vpack.c.bf16 %v1720, %v1719
        %v1746 = vpack.c.bf16 %v1722, %v1721
        %v1747 = vpack.c.bf16 %v1724, %v1723
        %v1748 = vpack.c.bf16 %v1726, %v1725
        %v1749 = vpack.c.bf16 %v1728, %v1727
        %v1750 = vpack.c.bf16 %v1730, %v1729
        %v1751 = vpack.c.bf16 %v1732, %v1731
        %v1752 = vpack.c.bf16 %v1734, %v1733
        %v1753 = vpack.c.bf16 %v1736, %v1735
        %v1754 = vpack.c.bf16 %v1738, %v1737
        %v1771 = vunpack.c.l.b16 %v1739
        %v1772 = vunpack.c.h.b16 %v1739
        %v1773 = vunpack.c.l.b16 %v1740
        %v1774 = vunpack.c.h.b16 %v1740
        %v1775 = vunpack.c.l.b16 %v1741
        %v1776 = vunpack.c.h.b16 %v1741
        %v1777 = vunpack.c.l.b16 %v1742
        %v1778 = vunpack.c.h.b16 %v1742
        %v1779 = vunpack.c.l.b16 %v1743
        %v1780 = vunpack.c.h.b16 %v1743
        %v1781 = vunpack.c.l.b16 %v1744
        %v1782 = vunpack.c.h.b16 %v1744
        %v1783 = vunpack.c.l.b16 %v1745
        %v1784 = vunpack.c.h.b16 %v1745
        %v1785 = vunpack.c.l.b16 %v1746
        %v1786 = vunpack.c.h.b16 %v1746
        %v1787 = vunpack.c.l.b16 %v1747
        %v1788 = vunpack.c.h.b16 %v1747
        %v1789 = vunpack.c.l.b16 %v1748
        %v1790 = vunpack.c.h.b16 %v1748
        %v1791 = vunpack.c.l.b16 %v1749
        %v1792 = vunpack.c.h.b16 %v1749
        %v1793 = vunpack.c.l.b16 %v1750
        %v1794 = vunpack.c.h.b16 %v1750
        %v1795 = vunpack.c.l.b16 %v1751
        %v1796 = vunpack.c.h.b16 %v1751
        %v1797 = vunpack.c.l.b16 %v1752
        %v1798 = vunpack.c.h.b16 %v1752
        %v1799 = vunpack.c.l.b16 %v1753
        %v1800 = vunpack.c.h.b16 %v1753
        %v1801 = vunpack.c.l.b16 %v1754
        %v1802 = vunpack.c.h.b16 %v1754
        %v1803 = vpack.c.b16 %v1771, %v1771
        %v1804 = vpack.c.b16 %v1772, %v1772
        %v1805 = vpack.c.b16 %v1773, %v1773
        %v1806 = vpack.c.b16 %v1774, %v1774
        %v1807 = vpack.c.b16 %v1775, %v1775
        %v1808 = vpack.c.b16 %v1776, %v1776
        %v1809 = vpack.c.b16 %v1777, %v1777
        %v1810 = vpack.c.b16 %v1778, %v1778
        %v1811 = vpack.c.b16 %v1779, %v1779
        %v1812 = vpack.c.b16 %v1780, %v1780
        %v1813 = vpack.c.b16 %v1781, %v1781
        %v1814 = vpack.c.b16 %v1782, %v1782
        %v1815 = vpack.c.b16 %v1783, %v1783
        %v1816 = vpack.c.b16 %v1784, %v1784
        %v1817 = vpack.c.b16 %v1785, %v1785
        %v1818 = vpack.c.b16 %v1786, %v1786
        %v1819 = vpack.c.b16 %v1787, %v1787
        %v1820 = vpack.c.b16 %v1788, %v1788
        %v1821 = vpack.c.b16 %v1789, %v1789
        %v1822 = vpack.c.b16 %v1790, %v1790
        %v1823 = vpack.c.b16 %v1791, %v1791
        %v1824 = vpack.c.b16 %v1792, %v1792
        %v1825 = vpack.c.b16 %v1793, %v1793
        %v1826 = vpack.c.b16 %v1794, %v1794
        %v1827 = vpack.c.b16 %v1795, %v1795
        %v1828 = vpack.c.b16 %v1796, %v1796
        %v1829 = vpack.c.b16 %v1797, %v1797
        %v1830 = vpack.c.b16 %v1798, %v1798
        %v1831 = vpack.c.b16 %v1799, %v1799
        %v1832 = vpack.c.b16 %v1800, %v1800
        %v1833 = vpack.c.b16 %v1801, %v1801
        %v1834 = vpack.c.b16 %v1802, %v1802
        %vm1867 = vcmask 60416
        %1868 = vst.msk [vmem:[%s250] sm:$0xf] %vm1867, %v1803
        %1869 = vst.msk [vmem:[%s250 + $0x4] sm:$0xf] %vm1867, %v1804
        %1870 = vst.msk [vmem:[%s250 + $0x8] sm:$0xf] %vm1867, %v1805
        %1871 = vst.msk [vmem:[%s250 + $0xc] sm:$0xf] %vm1867, %v1806
        %1872 = vst.msk [vmem:[%s250 + $0x10] sm:$0xf] %vm1867, %v1807
        %1873 = vst.msk [vmem:[%s250 + $0x14] sm:$0xf] %vm1867, %v1808
        %1874 = vst.msk [vmem:[%s250 + $0x18] sm:$0xf] %vm1867, %v1809
        %1875 = vst.msk [vmem:[%s250 + $0x1c] sm:$0xf] %vm1867, %v1810
        %1876 = vst.msk [vmem:[%s250 + $0x20] sm:$0xf] %vm1867, %v1811
        %1877 = vst.msk [vmem:[%s250 + $0x24] sm:$0xf] %vm1867, %v1812
        %1878 = vst.msk [vmem:[%s250 + $0x28] sm:$0xf] %vm1867, %v1813
        %1879 = vst.msk [vmem:[%s250 + $0x2c] sm:$0xf] %vm1867, %v1814
        %1880 = vst.msk [vmem:[%s250 + $0x30] sm:$0xf] %vm1867, %v1815
        %1881 = vst.msk [vmem:[%s250 + $0x34] sm:$0xf] %vm1867, %v1816
        %1882 = vst.msk [vmem:[%s250 + $0x38] sm:$0xf] %vm1867, %v1817
        %1883 = vst.msk [vmem:[%s250 + $0x3c] sm:$0xf] %vm1867, %v1818
        %1884 = vst.msk [vmem:[%s250 + $0x40] sm:$0xf] %vm1867, %v1819
        %1885 = vst.msk [vmem:[%s250 + $0x44] sm:$0xf] %vm1867, %v1820
        %1886 = vst.msk [vmem:[%s250 + $0x48] sm:$0xf] %vm1867, %v1821
        %1887 = vst.msk [vmem:[%s250 + $0x4c] sm:$0xf] %vm1867, %v1822
        %1888 = vst.msk [vmem:[%s250 + $0x50] sm:$0xf] %vm1867, %v1823
        %1889 = vst.msk [vmem:[%s250 + $0x54] sm:$0xf] %vm1867, %v1824
        %1890 = vst.msk [vmem:[%s250 + $0x58] sm:$0xf] %vm1867, %v1825
        %1891 = vst.msk [vmem:[%s250 + $0x5c] sm:$0xf] %vm1867, %v1826
        %1892 = vst.msk [vmem:[%s250 + $0x60] sm:$0xf] %vm1867, %v1827
        %1893 = vst.msk [vmem:[%s250 + $0x64] sm:$0xf] %vm1867, %v1828
        %1894 = vst.msk [vmem:[%s250 + $0x68] sm:$0xf] %vm1867, %v1829
        %1895 = vst.msk [vmem:[%s250 + $0x6c] sm:$0xf] %vm1867, %v1830
        %1896 = vst.msk [vmem:[%s250 + $0x70] sm:$0xf] %vm1867, %v1831
        %1897 = vst.msk [vmem:[%s250 + $0x74] sm:$0xf] %vm1867, %v1832
        %1898 = vst.msk [vmem:[%s250 + $0x78] sm:$0xf] %vm1867, %v1833
        %1899 = vst.msk [vmem:[%s250 + $0x7c] sm:$0xf] %vm1867, %v1834
        %v1900 = vsel %vm1663, %v1707, 0.0
        %v1901 = vsel %vm1663, %v1708, 0.0
        %v1902 = vadd.f32 %v1900, %v1901
        %v1903 = vsel %vm1663, %v1709, 0.0
        %v1904 = vadd.f32 %v1902, %v1903
        %v1905 = vsel %vm1663, %v1710, 0.0
        %v1906 = vadd.f32 %v1904, %v1905
        %v1907 = vsel %vm1663, %v1711, 0.0
        %v1908 = vadd.f32 %v1906, %v1907
        %v1909 = vsel %vm1663, %v1712, 0.0
        %v1910 = vadd.f32 %v1908, %v1909
        %v1911 = vsel %vm1663, %v1713, 0.0
        %v1912 = vadd.f32 %v1910, %v1911
        %v1913 = vsel %vm1663, %v1714, 0.0
        %v1914 = vadd.f32 %v1912, %v1913
        %v1915 = vsel %vm1663, %v1715, 0.0
        %v1916 = vadd.f32 %v1914, %v1915
        %v1917 = vsel %vm1663, %v1716, 0.0
        %v1918 = vadd.f32 %v1916, %v1917
        %v1919 = vsel %vm1663, %v1717, 0.0
        %v1920 = vadd.f32 %v1918, %v1919
        %v1921 = vsel %vm1663, %v1718, 0.0
        %v1922 = vadd.f32 %v1920, %v1921
        %v1923 = vsel %vm1663, %v1719, 0.0
        %v1924 = vadd.f32 %v1922, %v1923
        %v1925 = vsel %vm1663, %v1720, 0.0
        %v1926 = vadd.f32 %v1924, %v1925
        %v1927 = vsel %vm1663, %v1721, 0.0
        %v1928 = vadd.f32 %v1926, %v1927
        %v1929 = vsel %vm1663, %v1722, 0.0
        %v1930 = vadd.f32 %v1928, %v1929
        %v1931 = vsel %vm1663, %v1723, 0.0
        %v1932 = vadd.f32 %v1930, %v1931
        %v1933 = vsel %vm1663, %v1724, 0.0
        %v1934 = vadd.f32 %v1932, %v1933
        %v1935 = vsel %vm1663, %v1725, 0.0
        %v1936 = vadd.f32 %v1934, %v1935
        %v1937 = vsel %vm1663, %v1726, 0.0
        %v1938 = vadd.f32 %v1936, %v1937
        %v1939 = vsel %vm1663, %v1727, 0.0
        %v1940 = vadd.f32 %v1938, %v1939
        %v1941 = vsel %vm1663, %v1728, 0.0
        %v1942 = vadd.f32 %v1940, %v1941
        %v1943 = vsel %vm1663, %v1729, 0.0
        %v1944 = vadd.f32 %v1942, %v1943
        %v1945 = vsel %vm1663, %v1730, 0.0
        %v1946 = vadd.f32 %v1944, %v1945
        %v1947 = vsel %vm1663, %v1731, 0.0
        %v1948 = vadd.f32 %v1946, %v1947
        %v1949 = vsel %vm1663, %v1732, 0.0
        %v1950 = vadd.f32 %v1948, %v1949
        %v1951 = vsel %vm1663, %v1733, 0.0
        %v1952 = vadd.f32 %v1950, %v1951
        %v1953 = vsel %vm1663, %v1734, 0.0
        %v1954 = vadd.f32 %v1952, %v1953
        %v1955 = vsel %vm1663, %v1735, 0.0
        %v1956 = vadd.f32 %v1954, %v1955
        %v1957 = vsel %vm1663, %v1736, 0.0
        %v1958 = vadd.f32 %v1956, %v1957
        %v1959 = vsel %vm1663, %v1737, 0.0
        %v1960 = vadd.f32 %v1958, %v1959
        %v1961 = vsel %vm1663, %v1738, 0.0
        %v1962 = vadd.f32 %v1960, %v1961
        %v1963 = vrot.slane %v1962, 4
        %v1964 = vadd.f32 %v1962, %v1963
        %v1965 = vrot.slane %v1964, 2
        %v1966 = vadd.f32 %v1964, %v1965
        %v1967 = vrot.slane %v1966, 1
        %v1968 = vadd.f32 %v1966, %v1967
        %v1969 = vmul.f32 %v1707, %v1707
        %v1970 = vmul.f32 %v1708, %v1708
        %v1971 = vmul.f32 %v1709, %v1709
        %v1972 = vmul.f32 %v1710, %v1710
        %v1973 = vmul.f32 %v1711, %v1711
        %v1974 = vmul.f32 %v1712, %v1712
        %v1975 = vmul.f32 %v1713, %v1713
        %v1976 = vmul.f32 %v1714, %v1714
        %v1977 = vmul.f32 %v1715, %v1715
        %v1978 = vmul.f32 %v1716, %v1716
        %v1979 = vmul.f32 %v1717, %v1717
        %v1980 = vmul.f32 %v1718, %v1718
        %v1981 = vmul.f32 %v1719, %v1719
        %v1982 = vmul.f32 %v1720, %v1720
        %v1983 = vmul.f32 %v1721, %v1721
        %v1984 = vmul.f32 %v1722, %v1722
        %v1985 = vmul.f32 %v1723, %v1723
        %v1986 = vmul.f32 %v1724, %v1724
        %v1987 = vmul.f32 %v1725, %v1725
        %v1988 = vmul.f32 %v1726, %v1726
        %v1989 = vmul.f32 %v1727, %v1727
        %v1990 = vmul.f32 %v1728, %v1728
        %v1991 = vmul.f32 %v1729, %v1729
        %v1992 = vmul.f32 %v1730, %v1730
        %v1993 = vmul.f32 %v1731, %v1731
        %v1994 = vmul.f32 %v1732, %v1732
        %v1995 = vmul.f32 %v1733, %v1733
        %v1996 = vmul.f32 %v1734, %v1734
        %v1997 = vmul.f32 %v1735, %v1735
        %v1998 = vmul.f32 %v1736, %v1736
        %v1999 = vmul.f32 %v1737, %v1737
        %v2000 = vmul.f32 %v1738, %v1738
        %v2001 = vsel %vm1663, %v1969, 0.0
        %v2002 = vsel %vm1663, %v1970, 0.0
        %v2003 = vadd.f32 %v2001, %v2002
        %v2004 = vsel %vm1663, %v1971, 0.0
        %v2005 = vadd.f32 %v2003, %v2004
        %v2006 = vsel %vm1663, %v1972, 0.0
        %v2007 = vadd.f32 %v2005, %v2006
        %v2008 = vsel %vm1663, %v1973, 0.0
        %v2009 = vadd.f32 %v2007, %v2008
        %v2010 = vsel %vm1663, %v1974, 0.0
        %v2011 = vadd.f32 %v2009, %v2010
        %v2012 = vsel %vm1663, %v1975, 0.0
        %v2013 = vadd.f32 %v2011, %v2012
        %v2014 = vsel %vm1663, %v1976, 0.0
        %v2015 = vadd.f32 %v2013, %v2014
        %v2016 = vsel %vm1663, %v1977, 0.0
        %v2017 = vadd.f32 %v2015, %v2016
        %v2018 = vsel %vm1663, %v1978, 0.0
        %v2019 = vadd.f32 %v2017, %v2018
        %v2020 = vsel %vm1663, %v1979, 0.0
        %v2021 = vadd.f32 %v2019, %v2020
        %v2022 = vsel %vm1663, %v1980, 0.0
        %v2023 = vadd.f32 %v2021, %v2022
        %v2024 = vsel %vm1663, %v1981, 0.0
        %v2025 = vadd.f32 %v2023, %v2024
        %v2026 = vsel %vm1663, %v1982, 0.0
        %v2027 = vadd.f32 %v2025, %v2026
        %v2028 = vsel %vm1663, %v1983, 0.0
        %v2029 = vadd.f32 %v2027, %v2028
        %v2030 = vsel %vm1663, %v1984, 0.0
        %v2031 = vadd.f32 %v2029, %v2030
        %v2032 = vsel %vm1663, %v1985, 0.0
        %v2033 = vadd.f32 %v2031, %v2032
        %v2034 = vsel %vm1663, %v1986, 0.0
        %v2035 = vadd.f32 %v2033, %v2034
        %v2036 = vsel %vm1663, %v1987, 0.0
        %v2037 = vadd.f32 %v2035, %v2036
        %v2038 = vsel %vm1663, %v1988, 0.0
        %v2039 = vadd.f32 %v2037, %v2038
        %v2040 = vsel %vm1663, %v1989, 0.0
        %v2041 = vadd.f32 %v2039, %v2040
        %v2042 = vsel %vm1663, %v1990, 0.0
        %v2043 = vadd.f32 %v2041, %v2042
        %v2044 = vsel %vm1663, %v1991, 0.0
        %v2045 = vadd.f32 %v2043, %v2044
        %v2046 = vsel %vm1663, %v1992, 0.0
        %v2047 = vadd.f32 %v2045, %v2046
        %v2048 = vsel %vm1663, %v1993, 0.0
        %v2049 = vadd.f32 %v2047, %v2048
        %v2050 = vsel %vm1663, %v1994, 0.0
        %v2051 = vadd.f32 %v2049, %v2050
        %v2052 = vsel %vm1663, %v1995, 0.0
        %v2053 = vadd.f32 %v2051, %v2052
        %v2054 = vsel %vm1663, %v1996, 0.0
        %v2055 = vadd.f32 %v2053, %v2054
        %v2056 = vsel %vm1663, %v1997, 0.0
        %v2057 = vadd.f32 %v2055, %v2056
        %v2058 = vsel %vm1663, %v1998, 0.0
        %v2059 = vadd.f32 %v2057, %v2058
        %v2060 = vsel %vm1663, %v1999, 0.0
        %v2061 = vadd.f32 %v2059, %v2060
        %v2062 = vsel %vm1663, %v2000, 0.0
        %v2063 = vadd.f32 %v2061, %v2062
        %v2064 = vrot.slane %v2063, 4
        %v2065 = vadd.f32 %v2063, %v2064
        %v2066 = vrot.slane %v2065, 2
        %v2067 = vadd.f32 %v2065, %v2066
        %v2068 = vrot.slane %v2067, 1
        %v2069 = vadd.f32 %v2067, %v2068
        %vm2070 = vcmask 1040384
        %v2071 = vsel %vm2070, %v1968, %v2069
        %v2072 = vsel %vm488, %v2071, 0.0
        %2073 = vst.msk [vmem:[%s255] sm:$0xff] %vm1663, %v2072
      $region40: #{aspp_forward.2} parent=31 // pred_fallthru
        _
      %s2074 = smul.u32 32, %s20
      %p2075 = scmp.lt.s32.totalorder %s2074, 63
      %s2076 = scalar_select %p2075, %s2074, 63
      %s2077 = smul.addr %s2076, 4
      %s2078 = scalar_lea.vmem %s3, %s2077
      %p2079 = scmp.lt.s32.totalorder %s20, 1
      %s2080 = scalar_select %p2079, %s20, 1
      %s2081 = smul.addr %s2080, 8
      %s2082 = scalar_lea.vmem %s4, %s2081
      // Predicated region
      $region41: #{aspp_forward.2} parent=31 // pred_check
        %p2083 = pneg %p123
      $region42: #{aspp_forward.2} parent=31 // pred_check_branch
        %2085 = sbr.rel (%p2083) target = $region44
      $region43: #{aspp_forward.2} parent=31 // pred_region
        %s2086 = smul.u32 32, %s20
      $region44: #{aspp_forward.2} parent=31 // pred_fallthru
        _
      // Predicated region
      $region45: #{aspp_forward.2} parent=31 // pred_check
        %p2087 = pneg %p149
      $region46: #{aspp_forward.2} parent=31 // pred_check_branch
        %2089 = sbr.rel (%p2087) target = $region48
      $region47: #{aspp_forward.2} parent=31 // pred_region
        _
      $region48: #{aspp_forward.2} parent=31 // pred_fallthru
        _
    $region32: #{aspp_forward.2} parent=5 // pred_fallthru
      _
    %p2090 = scmp.le.s32.totalorder 2, %s11
    // Predicated region
    $region49: #{aspp_forward.2} parent=5 // pred_check
      %p2091 = pneg %p2090
    $region50: #{aspp_forward.2} parent=5 // pred_check_branch
      %2093 = sbr.rel (%p2091) target = $region52
    $region51: #{aspp_forward.2} parent=5 // pred_region
      %s2094 = ssub.s32 %s11, 2
      // Predicated region
      $region53: #{aspp_forward.2} parent=51 // pred_check
        %p2095 = pneg %p129
      $region54: #{aspp_forward.2} parent=51 // pred_check_branch
        %2097 = sbr.rel (%p2095) target = $region56
      $region55: #{aspp_forward.2} parent=51 // pred_region
        %s2098 = smul.u32 32, %s22
        %p2099 = scmp.lt.s32.totalorder %s2098, 63
        %s2100 = scalar_select %p2099, %s2098, 63
        %s2101 = smul.addr %s2100, 4
        %s2102 = scalar_lea.vmem %s3, %s2101
      $region56: #{aspp_forward.2} parent=51 // pred_fallthru
        _
      // Predicated region
      $region57: #{aspp_forward.2} parent=51 // pred_check
        %p2103 = pneg %p155
      $region58: #{aspp_forward.2} parent=51 // pred_check_branch
        %2105 = sbr.rel (%p2103) target = $region60
      $region59: #{aspp_forward.2} parent=51 // pred_region
        %p2106 = scmp.lt.s32.totalorder %s22, 1
        %s2107 = scalar_select %p2106, %s22, 1
        %s2108 = smul.addr %s2107, 8
        %s2109 = scalar_lea.vmem %s4, %s2108
      $region60: #{aspp_forward.2} parent=51 // pred_fallthru
        _
    $region52: #{aspp_forward.2} parent=5 // pred_fallthru
      _
  $region6: #{aspp_forward.2} parent=0 // loop_footer
    %s15 = sadd.s32 1, %s11
  $region7: #{aspp_forward.2} parent=0 // loop_footer_branch
    %10 = sbr.rel target = $region3
  $region8: #{aspp_forward.2} parent=0 // loop_exit
    _

</llo_original>
